<compile_context>
chip_gen: v5e
topology: v5e:2x2
jax: 0.10.0
libtpu: 0.0.40
codegen_flags: <defaults>
</compile_context>

<pallas_src>
import functools

import jax
import jax.numpy as jnp
from jax.experimental import pallas as pl
from jax.experimental.pallas import tpu as pltpu


# ----------------------------------------------------------------------------
# Pallas kernel: the whole decoder block for one batch element
# ----------------------------------------------------------------------------
def fused_decoder_kernel(x_ref, s_ref, kx_ref, wup_ref, bup_ref,
                         wg_ref, bg_ref, wx_ref, bx_ref, wpsi_ref, bpsi_ref,
                         wcat1_ref, b1_ref, bsk_ref, w2_ref, b2_ref,
                         o_ref, xps, cat_pad, out1_pad, col1, col2,
                         *, Ws, P):
    """ConvTranspose + attention gate + concat + conv1/skip + conv2/residual.

    Activations are (C, H*W) with the flattened spatial axis on lanes.  The
    up-sampling path and both bilinear resizes are one matmul against the
    host-built spatial-operator matrix KX; each 3x3 conv is one K-stacked
    matmul over an in-VMEM im2col scratch (wrap masks applied while building;
    the shifted tap copies with static lane offsets ARE the im2col build, so
    no extra per-tap relayout exists beyond them).
    """
    _, Co, M2 = o_ref.shape
    Cin = x_ref.shape[1]
    Cs = s_ref.shape[1]
    Ccat = cat_pad.shape[0]
    mmdt = wcat1_ref.dtype            # MXU operand dtype (f32 or bf16)

    # ---- ConvTranspose2d(k=2,s=2) + pixel shuffle (+ resize) + gating resize
    # xspat[:, i*M2:(i+1)*M2] = G_i @ x   (sub-pixel placement i = 2*a + b)
    # xspat[:, 4*M2:]        = Kbil @ x   (align_corners bilinear gating input)
    xspat = jnp.dot(x_ref[0], kx_ref[...], preferred_element_type=jnp.float32)
    for i in range(4):
        xps[pl.ds(i * Cin, Cin), :] = xspat[:, i * M2:(i + 1) * M2]
    up = (jnp.dot(wup_ref[...], xps[...].astype(mmdt),
                  preferred_element_type=jnp.float32) + bup_ref[...])
    g = xspat[:, 4 * M2:]

    # ---- attention gate: 1x1 convs with folded BN ---------------------------
    g1 = jnp.maximum(
        jnp.dot(wg_ref[...], g.astype(mmdt),
                preferred_element_type=jnp.float32) + bg_ref[...], 0.0)
    x1 = jnp.maximum(
        jnp.dot(wx_ref[...], s_ref[0],
                preferred_element_type=jnp.float32) + bx_ref[...], 0.0)
    z = g1 + x1                                   # ReLU(g1+x1) == g1+x1 here
    psi = jax.nn.sigmoid(
        jnp.sum(z * wpsi_ref[...], axis=0, keepdims=True) + bpsi_ref[...])
    attended = s_ref[0].astype(jnp.float32) * psi          # (Cs, M2)

    # masks that zero taps which would wrap across image rows (w-padding)
    w_pos = jax.lax.broadcasted_iota(jnp.int32, (1, M2), 1) % Ws
    not_left = (w_pos > 0).astype(jnp.float32)        # kills dw == -1 at w==0
    not_right = (w_pos < Ws - 1).astype(jnp.float32)  # kills dw == +1 at w==Ws-1

    # ---- cat = [attended ; up] into the lane-padded scratch -----------------
    # only the pad lanes need zeros (center span is fully overwritten); zeroing
    # stays per-step so "parallel" megacore sharding of the batch grid is safe.
    cat_pad[:, pl.ds(0, P)] = jnp.zeros((Ccat, P), jnp.float32)
    cat_pad[:, pl.ds(P + M2, P)] = jnp.zeros((Ccat, P), jnp.float32)
    cat_pad[pl.ds(0, Cs), pl.ds(P, M2)] = attended
    cat_pad[pl.ds(Cs, Ccat - Cs), pl.ds(P, M2)] = up

    # ---- conv1 (3x3, BN folded) + skip_conv (1x1): ONE matmul ---------------
    t = 0
    for dh in (-1, 0, 1):
        for dw in (-1, 0, 1):
            tap = cat_pad[:, pl.ds(P + dh * Ws + dw, M2)]
            if dw == -1:
                tap = tap * not_left
            elif dw == 1:
                tap = tap * not_right
            col1[pl.ds(t * Ccat, Ccat), :] = tap
            t += 1
    r1 = jnp.dot(wcat1_ref[...], col1[...].astype(mmdt),
                 preferred_element_type=jnp.float32)          # (2*Co, M2)
    ident = r1[Co:2 * Co, :] + bsk_ref[...]                   # skip_conv(cat)
    out1 = jnp.maximum(r1[:Co, :] + b1_ref[...], 0.0) + ident  # dropout == id

    # ---- conv2 (3x3, BN folded) + residual: ONE matmul ----------------------
    out1_pad[:, pl.ds(0, P)] = jnp.zeros((Co, P), jnp.float32)
    out1_pad[:, pl.ds(P + M2, P)] = jnp.zeros((Co, P), jnp.float32)
    out1_pad[:, pl.ds(P, M2)] = out1
    t = 0
    for dh in (-1, 0, 1):
        for dw in (-1, 0, 1):
            tap = out1_pad[:, pl.ds(P + dh * Ws + dw, M2)]
            if dw == -1:
                tap = tap * not_left
            elif dw == 1:
                tap = tap * not_right
            col2[pl.ds(t * Co, Co), :] = tap
            t += 1
    acc2 = jnp.dot(w2_ref[...], col2[...].astype(mmdt),
                   preferred_element_type=jnp.float32)
    o_ref[0] = jnp.maximum(acc2 + b2_ref[...], 0.0) + out1     # lane-dense store


# ----------------------------------------------------------------------------
# Host-side helpers: BN folding, separable align_corners / placement operators
# ----------------------------------------------------------------------------
def fold_bn(W, b, gamma, beta, mean, var, eps=1e-5):
    # BN(conv(x)) == (scale*W) x + (scale*(b-mean)+beta)
    scale = gamma / jnp.sqrt(var + eps)
    Wf = W * scale.reshape((-1,) + (1,) * (W.ndim - 1))
    bf = (b - mean) * scale + beta
    return Wf, bf


def _bilinear_matrix(out_size, in_size):
    # 1-D operator of F.interpolate(mode='bilinear', align_corners=True)
    if in_size == 1:
        return jnp.ones((out_size, 1), jnp.float32)
    if out_size == 1:
        return jnp.zeros((1, in_size), jnp.float32).at[0, 0].set(1.0)
    src = jnp.arange(out_size, dtype=jnp.float32) * (in_size - 1) / (out_size - 1)
    i0 = jnp.clip(jnp.floor(src).astype(jnp.int32), 0, in_size - 1)
    i1 = jnp.clip(i0 + 1, 0, in_size - 1)
    w = src - i0.astype(jnp.float32)
    eye = jnp.eye(in_size, dtype=jnp.float32)
    return eye[i0] * (1.0 - w)[:, None] + eye[i1] * w[:, None]


def _spatial_operator(Hx, Wx, Hs, Ws):
    """(Mx, 5*M2): four sub-pixel ConvTranspose placements (pixel shuffle,
    composed with an align_corners resize iff 2*(Hx,Wx) != (Hs,Ws)) followed by
    the align_corners bilinear operator for the attention-gate gating input."""
    Hu, Wu = 2 * Hx, 2 * Wx
    kres = None
    if (Hu, Wu) != (Hs, Ws):
        kres = jnp.kron(_bilinear_matrix(Hs, Hu), _bilinear_matrix(Ws, Wu))
    blocks = []
    for a in (0, 1):
        eh = (jnp.arange(Hu)[:, None] == 2 * jnp.arange(Hx)[None, :] + a)
        for b in (0, 1):
            ew = (jnp.arange(Wu)[:, None] == 2 * jnp.arange(Wx)[None, :] + b)
            gab = jnp.kron(eh.astype(jnp.float32), ew.astype(jnp.float32))
            if kres is not None:
                gab = kres @ gab
            blocks.append(gab.T)                        # (Mx, M2)
    kbil = jnp.kron(_bilinear_matrix(Hs, Hx), _bilinear_matrix(Ws, Wx))
    blocks.append(kbil.T)
    return jnp.concatenate(blocks, axis=1)              # (Mx, 5*M2)


def bilinear_resize_nchw(x, out_h, out_w):
    # reference-only: F.interpolate(mode='bilinear', align_corners=True), NCHW
    N, C, H, W = x.shape
    if (H, W) == (out_h, out_w):
        return x

    def coords(out_size, in_size):
        if out_size == 1:
            return (jnp.zeros((1,), jnp.float32),
                    jnp.zeros((1,), jnp.int32), jnp.zeros((1,), jnp.int32))
        src = jnp.arange(out_size, dtype=jnp.float32) * (in_size - 1) / (out_size - 1)
        i0 = jnp.clip(jnp.floor(src).astype(jnp.int32), 0, in_size - 1)
        i1 = jnp.clip(i0 + 1, 0, in_size - 1)
        return src - i0.astype(jnp.float32), i0, i1

    wh, h0, h1 = coords(out_h, H)
    ww, w0, w1 = coords(out_w, W)
    xr = (x[:, :, h0, :] * (1.0 - wh)[None, None, :, None]
          + x[:, :, h1, :] * wh[None, None, :, None])
    out = (xr[:, :, :, w0] * (1.0 - ww)[None, None, None, :]
           + xr[:, :, :, w1] * ww[None, None, None, :])
    return out


# ----------------------------------------------------------------------------
# Forward pass (single fused pallas_call) and pure-JAX reference
# ----------------------------------------------------------------------------
def enhanced_decoder_block_pallas(x, skip, p, *, use_bf16=True):
    N, Cin, Hx, Wx = x.shape
    _, Cs, Hs, Ws = skip.shape
    Co = p['up_w'].shape[1]
    Ci = p['ag_wg'].shape[0]
    Ccat = Cs + Co
    Mx = Hx * Wx
    M2 = Hs * Ws
    mmdt = jnp.bfloat16 if use_bf16 else jnp.float32

    # ---- host-built spatial operator (ConvTranspose placement + resizes) ----
    kx = _spatial_operator(Hx, Wx, Hs, Ws)                        # (Mx, 5*M2)

    # ---- fold inference-mode BatchNorm, build K-stacked conv weights --------
    wup = p['up_w'].transpose(1, 2, 3, 0).reshape(Co, 4 * Cin)    # (co|a,b,ci)
    Wg, bg = fold_bn(p['ag_wg'][:, :, 0, 0], p['ag_bg'], *p['ag_bng'])
    Wxm, bx = fold_bn(p['ag_wx'][:, :, 0, 0], p['ag_bx'], *p['ag_bnx'])
    Wpsi, bpsi = fold_bn(p['ag_wpsi'][:, :, 0, 0], p['ag_bpsi'], *p['ag_bnpsi'])
    W1f, b1f = fold_bn(p['conv1_w'], p['conv1_b'], *p['bn1'])
    W2f, b2f = fold_bn(p['conv2_w'], p['conv2_b'], *p['bn2'])
    w1c = W1f.transpose(0, 2, 3, 1).reshape(Co, 9 * Ccat)         # tap-major K
    wsk = jnp.zeros((Co, 9 * Ccat), jnp.float32)
    wsk = wsk.at[:, 4 * Ccat:5 * Ccat].set(p['skip_w'][:, :, 0, 0])  # center tap
    wcat1 = jnp.concatenate([w1c, wsk], axis=0)                   # (2*Co, 9*Ccat)
    w2c = W2f.transpose(0, 2, 3, 1).reshape(Co, 9 * Co)

    x_flat = x.reshape(N, Cin, Mx).astype(mmdt)
    skip_flat = skip.reshape(N, Cs, M2).astype(mmdt)

    # lane padding of the tap scratches: 128-aligned and >= Ws+1 per side
    P = ((Ws + 1 + 127) // 128) * 128
    Lpad = M2 + 2 * P

    # VMEM budget derived from the actual working set (not a fixed 32 MiB).
    # TODO(synk): add an H-row grid axis (block (1, C, rows*Ws) + 1-row halo)
    # before scaling to large decoder shapes on v7x's 64 MiB VMEM.
    isz = 2 if use_bf16 else 4
    block_bytes = (
        (Cin * Mx + Cs * M2 + Mx * 5 * M2 + Co * 4 * Cin
         + 2 * Co * 9 * Ccat + Co * 9 * Co) * isz
        + (3 * Co + 3 * Ci + 1 + Co) * 4 + Co * M2 * 4)
    scratch_bytes = (4 * Cin * M2 + Ccat * Lpad + Co * Lpad
                     + 9 * Ccat * M2 + 9 * Co * M2) * 4
    vmem_limit = int(min(100 << 20,
                         max(16 << 20, 2 * (2 * block_bytes + scratch_bytes))))

    kernel = functools.partial(fused_decoder_kernel, Ws=Ws, P=P)
    b3 = lambda n: (n, 0, 0)
    c2 = lambda n: (0, 0)
    # TODO(synk): on single-TensorCore v5e/v6e a batched-lanes variant
    # ((C, N*M2) per call) would amortize the serial batch grid; grid=(N,) with
    # "parallel" is kept so v7x's two TensorCores split the batch.
    out = pl.pallas_call(
        kernel,
        out_shape=jax.ShapeDtypeStruct((N, Co, M2), jnp.float32),
        grid=(N,),
        in_specs=[
            pl.BlockSpec((1, Cin, Mx), b3),        # x (flattened)
            pl.BlockSpec((1, Cs, M2), b3),         # skip (flattened)
            pl.BlockSpec((Mx, 5 * M2), c2),        # spatial operator KX
            pl.BlockSpec((Co, 4 * Cin), c2),       # ConvTranspose weights
            pl.BlockSpec((Co, 1), c2),             # ConvTranspose bias
            pl.BlockSpec((Ci, Cin), c2),           # W_g   (folded)
            pl.BlockSpec((Ci, 1), c2),             # b_g
            pl.BlockSpec((Ci, Cs), c2),            # W_x   (folded)
            pl.BlockSpec((Ci, 1), c2),             # b_x
            pl.BlockSpec((Ci, 1), c2),             # W_psi (folded, column)
            pl.BlockSpec((1, 1), c2),              # b_psi
            pl.BlockSpec((2 * Co, 9 * Ccat), c2),  # [conv1 ; skip_conv] weights
            pl.BlockSpec((Co, 1), c2),             # conv1 bias (folded)
            pl.BlockSpec((Co, 1), c2),             # skip_conv bias
            pl.BlockSpec((Co, 9 * Co), c2),        # conv2 weights (folded)
            pl.BlockSpec((Co, 1), c2),             # conv2 bias (folded)
        ],
        out_specs=pl.BlockSpec((1, Co, M2), b3),
        scratch_shapes=[pltpu.VMEM((4 * Cin, M2), jnp.float32),   # sub-pixel x
                        pltpu.VMEM((Ccat, Lpad), jnp.float32),    # padded cat
                        pltpu.VMEM((Co, Lpad), jnp.float32),      # padded out1
                        pltpu.VMEM((9 * Ccat, M2), jnp.float32),  # im2col conv1
                        pltpu.VMEM((9 * Co, M2), jnp.float32)],   # im2col conv2
        compiler_params=pltpu.CompilerParams(
            dimension_semantics=("parallel",),
            vmem_limit_bytes=vmem_limit),
    )(x_flat, skip_flat,
      kx.astype(mmdt), wup.astype(mmdt), p['up_b'].reshape(Co, 1),
      Wg.astype(mmdt), bg.reshape(Ci, 1), Wxm.astype(mmdt), bx.reshape(Ci, 1),
      Wpsi.reshape(Ci, 1), bpsi.reshape(1, 1),
      wcat1.astype(mmdt), b1f.reshape(Co, 1), p['skip_b'].reshape(Co, 1),
      w2c.astype(mmdt), b2f.reshape(Co, 1))
    return out.reshape(N, Co, Hs, Ws)


def enhanced_decoder_block_reference(x, skip, p):
    def conv1x1(t, W, b):  # W: (out, in)
        return jnp.einsum('nchw,oc->nohw', t, W) + b[None, :, None, None]

    def bn(t, gamma, beta, mean, var, eps=1e-5):
        inv = 1.0 / jnp.sqrt(var + eps)
        return ((t - mean[None, :, None, None]) * inv[None, :, None, None]
                * gamma[None, :, None, None] + beta[None, :, None, None])

    def conv3x3(t, W, b):  # W: (out, in, 3, 3), padding=1
        y = jax.lax.conv_general_dilated(
            t, W, (1, 1), 'SAME',
            dimension_numbers=('NCHW', 'OIHW', 'NCHW'))
        return y + b[None, :, None, None]

    N, Cin, Hx, Wx = x.shape
    _, Cs, Hs, Ws = skip.shape
    Co = p['up_w'].shape[1]

    g = bilinear_resize_nchw(x, Hs, Ws)
    g1 = jax.nn.relu(bn(conv1x1(g, p['ag_wg'][:, :, 0, 0], p['ag_bg']), *p['ag_bng']))
    x1 = jax.nn.relu(bn(conv1x1(skip, p['ag_wx'][:, :, 0, 0], p['ag_bx']), *p['ag_bnx']))
    psi = jax.nn.relu(g1 + x1)
    psi = jax.nn.sigmoid(
        bn(conv1x1(psi, p['ag_wpsi'][:, :, 0, 0], p['ag_bpsi']), *p['ag_bnpsi']))
    attended = skip * psi

    up = jnp.einsum('nchw,coab->nohawb', x, p['up_w'])
    up = up.reshape(N, Co, 2 * Hx, 2 * Wx) + p['up_b'][None, :, None, None]
    if up.shape[2:] != (Hs, Ws):
        up = bilinear_resize_nchw(up, Hs, Ws)

    cat = jnp.concatenate([attended, up], axis=1)
    iden = conv1x1(cat, p['skip_w'][:, :, 0, 0], p['skip_b'])
    o = jax.nn.relu(bn(conv3x3(cat, p['conv1_w'], p['conv1_b']), *p['bn1'])) + iden
    o = jax.nn.relu(bn(conv3x3(o, p['conv2_w'], p['conv2_b']), *p['bn2'])) + o
    return o


# ----------------------------------------------------------------------------
# Deterministic parameter init (shapes from the PyTorch __init__)
# ----------------------------------------------------------------------------
def init_params(key, Cin, Cs, Co):
    Ci = Cs // 2
    keys = list(jax.random.split(key, 64))
    it = iter(keys)

    def w(shape, scale=0.1):
        return jax.random.normal(next(it), shape, jnp.float32) * scale

    def bn_params(C):
        gamma = 1.0 + 0.1 * jax.random.normal(next(it), (C,), jnp.float32)
        beta = 0.1 * jax.random.normal(next(it), (C,), jnp.float32)
        mean = 0.1 * jax.random.normal(next(it), (C,), jnp.float32)
        var = 0.5 + 0.1 * jnp.abs(jax.random.normal(next(it), (C,), jnp.float32))
        return (gamma, beta, mean, var)

    p = {}
    p['ag_wg'] = w((Ci, Cin, 1, 1)); p['ag_bg'] = w((Ci,)); p['ag_bng'] = bn_params(Ci)
    p['ag_wx'] = w((Ci, Cs, 1, 1));  p['ag_bx'] = w((Ci,)); p['ag_bnx'] = bn_params(Ci)
    p['ag_wpsi'] = w((1, Ci, 1, 1)); p['ag_bpsi'] = w((1,)); p['ag_bnpsi'] = bn_params(1)
    p['up_w'] = w((Cin, Co, 2, 2));  p['up_b'] = w((Co,))
    p['conv1_w'] = w((Co, Co + Cs, 3, 3)); p['conv1_b'] = w((Co,)); p['bn1'] = bn_params(Co)
    p['conv2_w'] = w((Co, Co, 3, 3));      p['conv2_b'] = w((Co,)); p['bn2'] = bn_params(Co)
    p['skip_w'] = w((Co, Co + Cs, 1, 1));  p['skip_b'] = w((Co,))
    return p


if __name__ == "__main__":
    # in_channels=8, skip_channels=8, out_channels=8 (NCHW, like PyTorch)
    N, Cin, Cs, Co = 2, 8, 8, 8
    Hx = Wx = 8
    Hs = Ws = 16

    key = jax.random.PRNGKey(0)
    k1, k2, k3 = jax.random.split(key, 3)
    x = jax.random.normal(k1, (N, Cin, Hx, Wx), jnp.float32)
    skip = jax.random.normal(k2, (N, Cs, Hs, Ws), jnp.float32)
    params = init_params(k3, Cin, Cs, Co)

    ref = enhanced_decoder_block_reference(x, skip, params)

    # tight correctness check with f32 MXU operands
    fwd32 = jax.jit(functools.partial(enhanced_decoder_block_pallas, use_bf16=False))
    out32 = jax.block_until_ready(fwd32(x, skip, params))
    assert out32.shape == (N, Co, Hs, Ws), out32.shape
    err32 = float(jnp.max(jnp.abs(out32 - ref)))
    # tolerance absorbs XLA's default-precision conv/matmul in the reference
    assert err32 < 2e-2, f"f32 mismatch vs reference: max abs err = {err32}"

    # perf-default path: bf16 MXU operands (native single-pass on v6e/v7x,
    # half the HBM bytes).  Wider tolerance absorbs bf16 input rounding through
    # the two 3x3 convs plus the reference's own default-precision error.
    fwd16 = jax.jit(functools.partial(enhanced_decoder_block_pallas, use_bf16=True))
    out16 = jax.block_until_ready(fwd16(x, skip, params))
    err16 = float(jnp.max(jnp.abs(out16 - ref)))
    assert err16 < 6e-2, f"bf16 mismatch vs reference: max abs err = {err16}"

    print("KERNEL_OK")
</pallas_src>

<mosaic_0001>
module attributes {stable_mosaic.version = 11 : i64} {
  func.func @fused_decoder_kernel(%arg0: i32, %arg1: memref<1x8x64xf32, #tpu.memory_space<vmem>>, %arg2: memref<1x8x256xf32, #tpu.memory_space<vmem>>, %arg3: memref<64x1280xf32, #tpu.memory_space<vmem>>, %arg4: memref<8x32xf32, #tpu.memory_space<vmem>>, %arg5: memref<8x1xf32, #tpu.memory_space<vmem>>, %arg6: memref<4x8xf32, #tpu.memory_space<vmem>>, %arg7: memref<4x1xf32, #tpu.memory_space<vmem>>, %arg8: memref<4x8xf32, #tpu.memory_space<vmem>>, %arg9: memref<4x1xf32, #tpu.memory_space<vmem>>, %arg10: memref<4x1xf32, #tpu.memory_space<vmem>>, %arg11: memref<1x1xf32, #tpu.memory_space<vmem>>, %arg12: memref<16x144xf32, #tpu.memory_space<vmem>>, %arg13: memref<8x1xf32, #tpu.memory_space<vmem>>, %arg14: memref<8x1xf32, #tpu.memory_space<vmem>>, %arg15: memref<8x72xf32, #tpu.memory_space<vmem>>, %arg16: memref<8x1xf32, #tpu.memory_space<vmem>>, %arg17: memref<1x8x256xf32, #tpu.memory_space<vmem>>, %arg18: memref<32x256xf32, #tpu.memory_space<vmem>>, %arg19: memref<16x512xf32, #tpu.memory_space<vmem>>, %arg20: memref<8x512xf32, #tpu.memory_space<vmem>>, %arg21: memref<144x256xf32, #tpu.memory_space<vmem>>, %arg22: memref<72x256xf32, #tpu.memory_space<vmem>>) attributes {dimension_semantics = [#tpu.dimension_semantics<parallel>], iteration_bounds = array<i64: 2>, scalar_prefetch = 0 : i64, scratch_operands = 5 : i64, tpu.core_type = #tpu.core_type<tc>, window_params = [{transform_indices = @transform_0, window_bounds = array<i64: 1, 8, 64>}, {transform_indices = @transform_1, window_bounds = array<i64: 1, 8, 256>}, {pipeline_mode = #tpu.pipeline_mode<synchronous>, transform_indices = @transform_2, window_bounds = array<i64: 64, 1280>}, {pipeline_mode = #tpu.pipeline_mode<synchronous>, transform_indices = @transform_3, window_bounds = array<i64: 8, 32>}, {pipeline_mode = #tpu.pipeline_mode<synchronous>, transform_indices = @transform_4, window_bounds = array<i64: 8, 1>}, {pipeline_mode = #tpu.pipeline_mode<synchronous>, transform_indices = @transform_5, window_bounds = array<i64: 4, 8>}, {pipeline_mode = #tpu.pipeline_mode<synchronous>, transform_indices = @transform_6, window_bounds = array<i64: 4, 1>}, {pipeline_mode = #tpu.pipeline_mode<synchronous>, transform_indices = @transform_7, window_bounds = array<i64: 4, 8>}, {pipeline_mode = #tpu.pipeline_mode<synchronous>, transform_indices = @transform_8, window_bounds = array<i64: 4, 1>}, {pipeline_mode = #tpu.pipeline_mode<synchronous>, transform_indices = @transform_9, window_bounds = array<i64: 4, 1>}, {pipeline_mode = #tpu.pipeline_mode<synchronous>, transform_indices = @transform_10, window_bounds = array<i64: 1, 1>}, {pipeline_mode = #tpu.pipeline_mode<synchronous>, transform_indices = @transform_11, window_bounds = array<i64: 16, 144>}, {pipeline_mode = #tpu.pipeline_mode<synchronous>, transform_indices = @transform_12, window_bounds = array<i64: 8, 1>}, {pipeline_mode = #tpu.pipeline_mode<synchronous>, transform_indices = @transform_13, window_bounds = array<i64: 8, 1>}, {pipeline_mode = #tpu.pipeline_mode<synchronous>, transform_indices = @transform_14, window_bounds = array<i64: 8, 72>}, {pipeline_mode = #tpu.pipeline_mode<synchronous>, transform_indices = @transform_15, window_bounds = array<i64: 8, 1>}, {transform_indices = @transform_16, window_bounds = array<i64: 1, 8, 256>}]} {
    %c0 = arith.constant 0 : index
    %c0_0 = arith.constant 0 : index
    %c0_1 = arith.constant 0 : index
    %0 = vector.load %arg1[%c0, %c0_0, %c0_1] : memref<1x8x64xf32, #tpu.memory_space<vmem>>, vector<1x8x64xf32>
    %1 = vector.shape_cast %0 : vector<1x8x64xf32> to vector<8x64xf32>
    %c0_2 = arith.constant 0 : index
    %c0_3 = arith.constant 0 : index
    %2 = vector.load %arg3[%c0_2, %c0_3] : memref<64x1280xf32, #tpu.memory_space<vmem>>, vector<64x1280xf32>
    %cst = arith.constant dense<0.000000e+00> : vector<8x1280xf32>
    %3 = tpu.matmul %1, %2, %cst {dimension_numbers = #tpu.dot_dimension_numbers<[1], [0], [0], [1], [0, 0, 1, 1], [], []>} : vector<8x64xf32>, vector<64x1280xf32>, vector<8x1280xf32> -> vector<8x1280xf32>
    %4 = vector.extract_strided_slice %3 {offsets = [0, 0], sizes = [8, 256], strides = [1, 1]} : vector<8x1280xf32> to vector<8x256xf32>
    %c0_4 = arith.constant 0 : index
    %c0_5 = arith.constant 0 : index
    %5 = vector.load %arg18[%c0_4, %c0_5] : memref<32x256xf32, #tpu.memory_space<vmem>>, vector<8x256xf32>
    tpu.vector_store %arg18[%c0_4, %c0_5], %4 {strides = array<i32>} : memref<32x256xf32, #tpu.memory_space<vmem>>, vector<8x256xf32>,
    %6 = vector.extract_strided_slice %3 {offsets = [0, 256], sizes = [8, 256], strides = [1, 1]} : vector<8x1280xf32> to vector<8x256xf32>
    %c8 = arith.constant 8 : index
    %c0_6 = arith.constant 0 : index
    %7 = vector.load %arg18[%c8, %c0_6] : memref<32x256xf32, #tpu.memory_space<vmem>>, vector<8x256xf32>
    tpu.vector_store %arg18[%c8, %c0_6], %6 {strides = array<i32>} : memref<32x256xf32, #tpu.memory_space<vmem>>, vector<8x256xf32>,
    %8 = vector.extract_strided_slice %3 {offsets = [0, 512], sizes = [8, 256], strides = [1, 1]} : vector<8x1280xf32> to vector<8x256xf32>
    %c16 = arith.constant 16 : index
    %c0_7 = arith.constant 0 : index
    %9 = vector.load %arg18[%c16, %c0_7] : memref<32x256xf32, #tpu.memory_space<vmem>>, vector<8x256xf32>
    tpu.vector_store %arg18[%c16, %c0_7], %8 {strides = array<i32>} : memref<32x256xf32, #tpu.memory_space<vmem>>, vector<8x256xf32>,
    %10 = vector.extract_strided_slice %3 {offsets = [0, 768], sizes = [8, 256], strides = [1, 1]} : vector<8x1280xf32> to vector<8x256xf32>
    %c24 = arith.constant 24 : index
    %c0_8 = arith.constant 0 : index
    %11 = vector.load %arg18[%c24, %c0_8] : memref<32x256xf32, #tpu.memory_space<vmem>>, vector<8x256xf32>
    tpu.vector_store %arg18[%c24, %c0_8], %10 {strides = array<i32>} : memref<32x256xf32, #tpu.memory_space<vmem>>, vector<8x256xf32>,
    %c0_9 = arith.constant 0 : index
    %c0_10 = arith.constant 0 : index
    %12 = vector.load %arg4[%c0_9, %c0_10] : memref<8x32xf32, #tpu.memory_space<vmem>>, vector<8x32xf32>
    %c0_11 = arith.constant 0 : index
    %c0_12 = arith.constant 0 : index
    %13 = vector.load %arg18[%c0_11, %c0_12] : memref<32x256xf32, #tpu.memory_space<vmem>>, vector<32x256xf32>
    %cst_13 = arith.constant dense<0.000000e+00> : vector<8x256xf32>
    %14 = tpu.matmul %12, %13, %cst_13 {dimension_numbers = #tpu.dot_dimension_numbers<[1], [0], [0], [1], [0, 0, 1, 1], [], []>} : vector<8x32xf32>, vector<32x256xf32>, vector<8x256xf32> -> vector<8x256xf32>
    %c0_14 = arith.constant 0 : index
    %c0_15 = arith.constant 0 : index
    %15 = vector.load %arg5[%c0_14, %c0_15] : memref<8x1xf32, #tpu.memory_space<vmem>>, vector<8x1xf32>
    %16 = vector.broadcast %15 : vector<8x1xf32> to vector<8x256xf32>
    %17 = arith.addf %14, %16 : vector<8x256xf32>
    %18 = vector.extract_strided_slice %3 {offsets = [0, 1024], sizes = [8, 256], strides = [1, 1]} : vector<8x1280xf32> to vector<8x256xf32>
    %c0_16 = arith.constant 0 : index
    %c0_17 = arith.constant 0 : index
    %19 = vector.load %arg6[%c0_16, %c0_17] : memref<4x8xf32, #tpu.memory_space<vmem>>, vector<4x8xf32>
    %cst_18 = arith.constant dense<0.000000e+00> : vector<4x256xf32>
    %20 = tpu.matmul %19, %18, %cst_18 {dimension_numbers = #tpu.dot_dimension_numbers<[1], [0], [0], [1], [0, 0, 1, 1], [], []>} : vector<4x8xf32>, vector<8x256xf32>, vector<4x256xf32> -> vector<4x256xf32>
    %c0_19 = arith.constant 0 : index
    %c0_20 = arith.constant 0 : index
    %21 = vector.load %arg7[%c0_19, %c0_20] : memref<4x1xf32, #tpu.memory_space<vmem>>, vector<4x1xf32>
    %22 = vector.broadcast %21 : vector<4x1xf32> to vector<4x256xf32>
    %23 = arith.addf %20, %22 : vector<4x256xf32>
    %cst_21 = arith.constant 0.000000e+00 : f32
    %24 = vector.broadcast %cst_21 : f32 to vector<4x256xf32>
    %25 = arith.maximumf %23, %24 : vector<4x256xf32>
    %c0_22 = arith.constant 0 : index
    %c0_23 = arith.constant 0 : index
    %26 = vector.load %arg8[%c0_22, %c0_23] : memref<4x8xf32, #tpu.memory_space<vmem>>, vector<4x8xf32>
    %c0_24 = arith.constant 0 : index
    %c0_25 = arith.constant 0 : index
    %c0_26 = arith.constant 0 : index
    %27 = vector.load %arg2[%c0_24, %c0_25, %c0_26] : memref<1x8x256xf32, #tpu.memory_space<vmem>>, vector<1x8x256xf32>
    %28 = vector.shape_cast %27 : vector<1x8x256xf32> to vector<8x256xf32>
    %cst_27 = arith.constant dense<0.000000e+00> : vector<4x256xf32>
    %29 = tpu.matmul %26, %28, %cst_27 {dimension_numbers = #tpu.dot_dimension_numbers<[1], [0], [0], [1], [0, 0, 1, 1], [], []>} : vector<4x8xf32>, vector<8x256xf32>, vector<4x256xf32> -> vector<4x256xf32>
    %c0_28 = arith.constant 0 : index
    %c0_29 = arith.constant 0 : index
    %30 = vector.load %arg9[%c0_28, %c0_29] : memref<4x1xf32, #tpu.memory_space<vmem>>, vector<4x1xf32>
    %31 = vector.broadcast %30 : vector<4x1xf32> to vector<4x256xf32>
    %32 = arith.addf %29, %31 : vector<4x256xf32>
    %cst_30 = arith.constant 0.000000e+00 : f32
    %33 = vector.broadcast %cst_30 : f32 to vector<4x256xf32>
    %34 = arith.maximumf %32, %33 : vector<4x256xf32>
    %35 = arith.addf %25, %34 : vector<4x256xf32>
    %c0_31 = arith.constant 0 : index
    %c0_32 = arith.constant 0 : index
    %36 = vector.load %arg10[%c0_31, %c0_32] : memref<4x1xf32, #tpu.memory_space<vmem>>, vector<4x1xf32>
    %37 = vector.broadcast %36 : vector<4x1xf32> to vector<4x256xf32>
    %38 = arith.mulf %35, %37 : vector<4x256xf32>
    %cst_33 = arith.constant dense<0.000000e+00> : vector<256xf32>
    %39 = vector.multi_reduction <add>, %38, %cst_33 [0] : vector<4x256xf32> to vector<256xf32>
    %40 = vector.shape_cast %39 : vector<256xf32> to vector<1x256xf32>
    %c0_34 = arith.constant 0 : index
    %c0_35 = arith.constant 0 : index
    %41 = vector.load %arg11[%c0_34, %c0_35] : memref<1x1xf32, #tpu.memory_space<vmem>>, vector<1x1xf32>
    %42 = vector.broadcast %41 : vector<1x1xf32> to vector<1x256xf32>
    %43 = arith.addf %40, %42 : vector<1x256xf32>
    %44 = arith.negf %43 : vector<1x256xf32>
    %45 = math.exp %44 : vector<1x256xf32>
    %cst_36 = arith.constant 1.000000e+00 : f32
    %46 = vector.broadcast %cst_36 : f32 to vector<1x256xf32>
    %47 = arith.addf %46, %45 : vector<1x256xf32>
    %48 = arith.divf %46, %47 : vector<1x256xf32>
    %c0_37 = arith.constant 0 : index
    %c0_38 = arith.constant 0 : index
    %c0_39 = arith.constant 0 : index
    %49 = vector.load %arg2[%c0_37, %c0_38, %c0_39] : memref<1x8x256xf32, #tpu.memory_space<vmem>>, vector<1x8x256xf32>
    %50 = vector.shape_cast %49 : vector<1x8x256xf32> to vector<8x256xf32>
    %51 = vector.broadcast %48 : vector<1x256xf32> to vector<8x256xf32>
    %52 = arith.mulf %50, %51 : vector<8x256xf32>
    %53 = tpu.iota {dimensions = array<i32: 1>} : vector<1x256xi32>
    %c16_i32 = arith.constant 16 : i32
    %c0_i32 = arith.constant 0 : i32
    %54 = arith.cmpi eq, %c16_i32, %c0_i32 : i32
    %c1_i32 = arith.constant 1 : i32
    %55 = arith.select %54, %c1_i32, %c16_i32 : i32
    %56 = vector.broadcast %55 : i32 to vector<1x256xi32>
    %57 = arith.remsi %53, %56 : vector<1x256xi32>
    %c0_i32_40 = arith.constant 0 : i32
    %58 = vector.broadcast %c0_i32_40 : i32 to vector<1x256xi32>
    %59 = arith.cmpi ne, %57, %58 : vector<1x256xi32>
    %c0_i32_41 = arith.constant 0 : i32
    %60 = vector.broadcast %c0_i32_41 : i32 to vector<1x256xi32>
    %61 = arith.cmpi slt, %57, %60 : vector<1x256xi32>
    %c0_i32_42 = arith.constant 0 : i32
    %62 = arith.cmpi slt, %55, %c0_i32_42 : i32
    %63 = vector.broadcast %62 : i1 to vector<1x256xi1>
    %64 = vector.broadcast %63 : vector<1x256xi1> to vector<1x256xi1>
    %65 = arith.xori %61, %64 : vector<1x256xi1>
    %66 = arith.andi %65, %59 : vector<1x256xi1>
    %67 = vector.broadcast %55 : i32 to vector<1x256xi32>
    %68 = arith.addi %57, %67 : vector<1x256xi32>
    %69 = arith.select %66, %68, %57 : vector<1x256xi1>, vector<1x256xi32>
    %c0_i32_43 = arith.constant 0 : i32
    %70 = vector.broadcast %c0_i32_43 : i32 to vector<1x256xi32>
    %71 = arith.cmpi sgt, %69, %70 : vector<1x256xi32>
    %72 = arith.extui %71 : vector<1x256xi1> to vector<1x256xi32>
    %73 = arith.sitofp %72 : vector<1x256xi32> to vector<1x256xf32>
    %c15_i32 = arith.constant 15 : i32
    %74 = vector.broadcast %c15_i32 : i32 to vector<1x256xi32>
    %75 = arith.cmpi slt, %69, %74 : vector<1x256xi32>
    %76 = arith.extui %75 : vector<1x256xi1> to vector<1x256xi32>
    %77 = arith.sitofp %76 : vector<1x256xi32> to vector<1x256xf32>
    %cst_44 = arith.constant 0.000000e+00 : f32
    %78 = vector.broadcast %cst_44 : f32 to vector<16x128xf32>
    %c0_45 = arith.constant 0 : index
    %c0_46 = arith.constant 0 : index
    %79 = vector.load %arg19[%c0_45, %c0_46] : memref<16x512xf32, #tpu.memory_space<vmem>>, vector<16x128xf32>
    tpu.vector_store %arg19[%c0_45, %c0_46], %78 {strides = array<i32>} : memref<16x512xf32, #tpu.memory_space<vmem>>, vector<16x128xf32>,
    %cst_47 = arith.constant 0.000000e+00 : f32
    %80 = vector.broadcast %cst_47 : f32 to vector<16x128xf32>
    %c0_48 = arith.constant 0 : index
    %c384 = arith.constant 384 : index
    %81 = vector.load %arg19[%c0_48, %c384] : memref<16x512xf32, #tpu.memory_space<vmem>>, vector<16x128xf32>
    tpu.vector_store %arg19[%c0_48, %c384], %80 {strides = array<i32>} : memref<16x512xf32, #tpu.memory_space<vmem>>, vector<16x128xf32>,
    %c0_49 = arith.constant 0 : index
    %c128 = arith.constant 128 : index
    %82 = vector.load %arg19[%c0_49, %c128] : memref<16x512xf32, #tpu.memory_space<vmem>>, vector<8x256xf32>
    tpu.vector_store %arg19[%c0_49, %c128], %52 {strides = array<i32>} : memref<16x512xf32, #tpu.memory_space<vmem>>, vector<8x256xf32>,
    %c8_50 = arith.constant 8 : index
    %c128_51 = arith.constant 128 : index
    %83 = vector.load %arg19[%c8_50, %c128_51] : memref<16x512xf32, #tpu.memory_space<vmem>>, vector<8x256xf32>
    tpu.vector_store %arg19[%c8_50, %c128_51], %17 {strides = array<i32>} : memref<16x512xf32, #tpu.memory_space<vmem>>, vector<8x256xf32>,
    %c0_52 = arith.constant 0 : index
    %c111 = arith.constant 111 : index
    %84 = vector.load %arg19[%c0_52, %c111] : memref<16x512xf32, #tpu.memory_space<vmem>>, vector<16x256xf32>
    %85 = vector.broadcast %73 : vector<1x256xf32> to vector<16x256xf32>
    %86 = arith.mulf %84, %85 : vector<16x256xf32>
    %c0_53 = arith.constant 0 : index
    %c0_54 = arith.constant 0 : index
    %87 = vector.load %arg21[%c0_53, %c0_54] : memref<144x256xf32, #tpu.memory_space<vmem>>, vector<16x256xf32>
    tpu.vector_store %arg21[%c0_53, %c0_54], %86 {strides = array<i32>} : memref<144x256xf32, #tpu.memory_space<vmem>>, vector<16x256xf32>,
    %c0_55 = arith.constant 0 : index
    %c112 = arith.constant 112 : index
    %88 = vector.load %arg19[%c0_55, %c112] : memref<16x512xf32, #tpu.memory_space<vmem>>, vector<16x256xf32>
    %c16_56 = arith.constant 16 : index
    %c0_57 = arith.constant 0 : index
    %89 = vector.load %arg21[%c16_56, %c0_57] : memref<144x256xf32, #tpu.memory_space<vmem>>, vector<16x256xf32>
    tpu.vector_store %arg21[%c16_56, %c0_57], %88 {strides = array<i32>} : memref<144x256xf32, #tpu.memory_space<vmem>>, vector<16x256xf32>,
    %c0_58 = arith.constant 0 : index
    %c113 = arith.constant 113 : index
    %90 = vector.load %arg19[%c0_58, %c113] : memref<16x512xf32, #tpu.memory_space<vmem>>, vector<16x256xf32>
    %91 = vector.broadcast %77 : vector<1x256xf32> to vector<16x256xf32>
    %92 = arith.mulf %90, %91 : vector<16x256xf32>
    %c32 = arith.constant 32 : index
    %c0_59 = arith.constant 0 : index
    %93 = vector.load %arg21[%c32, %c0_59] : memref<144x256xf32, #tpu.memory_space<vmem>>, vector<16x256xf32>
    tpu.vector_store %arg21[%c32, %c0_59], %92 {strides = array<i32>} : memref<144x256xf32, #tpu.memory_space<vmem>>, vector<16x256xf32>,
    %c0_60 = arith.constant 0 : index
    %c127 = arith.constant 127 : index
    %94 = vector.load %arg19[%c0_60, %c127] : memref<16x512xf32, #tpu.memory_space<vmem>>, vector<16x256xf32>
    %95 = vector.broadcast %73 : vector<1x256xf32> to vector<16x256xf32>
    %96 = arith.mulf %94, %95 : vector<16x256xf32>
    %c48 = arith.constant 48 : index
    %c0_61 = arith.constant 0 : index
    %97 = vector.load %arg21[%c48, %c0_61] : memref<144x256xf32, #tpu.memory_space<vmem>>, vector<16x256xf32>
    tpu.vector_store %arg21[%c48, %c0_61], %96 {strides = array<i32>} : memref<144x256xf32, #tpu.memory_space<vmem>>, vector<16x256xf32>,
    %c0_62 = arith.constant 0 : index
    %c128_63 = arith.constant 128 : index
    %98 = vector.load %arg19[%c0_62, %c128_63] : memref<16x512xf32, #tpu.memory_space<vmem>>, vector<16x256xf32>
    %c64 = arith.constant 64 : index
    %c0_64 = arith.constant 0 : index
    %99 = vector.load %arg21[%c64, %c0_64] : memref<144x256xf32, #tpu.memory_space<vmem>>, vector<16x256xf32>
    tpu.vector_store %arg21[%c64, %c0_64], %98 {strides = array<i32>} : memref<144x256xf32, #tpu.memory_space<vmem>>, vector<16x256xf32>,
    %c0_65 = arith.constant 0 : index
    %c129 = arith.constant 129 : index
    %100 = vector.load %arg19[%c0_65, %c129] : memref<16x512xf32, #tpu.memory_space<vmem>>, vector<16x256xf32>
    %101 = vector.broadcast %77 : vector<1x256xf32> to vector<16x256xf32>
    %102 = arith.mulf %100, %101 : vector<16x256xf32>
    %c80 = arith.constant 80 : index
    %c0_66 = arith.constant 0 : index
    %103 = vector.load %arg21[%c80, %c0_66] : memref<144x256xf32, #tpu.memory_space<vmem>>, vector<16x256xf32>
    tpu.vector_store %arg21[%c80, %c0_66], %102 {strides = array<i32>} : memref<144x256xf32, #tpu.memory_space<vmem>>, vector<16x256xf32>,
    %c0_67 = arith.constant 0 : index
    %c143 = arith.constant 143 : index
    %104 = vector.load %arg19[%c0_67, %c143] : memref<16x512xf32, #tpu.memory_space<vmem>>, vector<16x256xf32>
    %105 = vector.broadcast %73 : vector<1x256xf32> to vector<16x256xf32>
    %106 = arith.mulf %104, %105 : vector<16x256xf32>
    %c96 = arith.constant 96 : index
    %c0_68 = arith.constant 0 : index
    %107 = vector.load %arg21[%c96, %c0_68] : memref<144x256xf32, #tpu.memory_space<vmem>>, vector<16x256xf32>
    tpu.vector_store %arg21[%c96, %c0_68], %106 {strides = array<i32>} : memref<144x256xf32, #tpu.memory_space<vmem>>, vector<16x256xf32>,
    %c0_69 = arith.constant 0 : index
    %c144 = arith.constant 144 : index
    %108 = vector.load %arg19[%c0_69, %c144] : memref<16x512xf32, #tpu.memory_space<vmem>>, vector<16x256xf32>
    %c112_70 = arith.constant 112 : index
    %c0_71 = arith.constant 0 : index
    %109 = vector.load %arg21[%c112_70, %c0_71] : memref<144x256xf32, #tpu.memory_space<vmem>>, vector<16x256xf32>
    tpu.vector_store %arg21[%c112_70, %c0_71], %108 {strides = array<i32>} : memref<144x256xf32, #tpu.memory_space<vmem>>, vector<16x256xf32>,
    %c0_72 = arith.constant 0 : index
    %c145 = arith.constant 145 : index
    %110 = vector.load %arg19[%c0_72, %c145] : memref<16x512xf32, #tpu.memory_space<vmem>>, vector<16x256xf32>
    %111 = vector.broadcast %77 : vector<1x256xf32> to vector<16x256xf32>
    %112 = arith.mulf %110, %111 : vector<16x256xf32>
    %c128_73 = arith.constant 128 : index
    %c0_74 = arith.constant 0 : index
    %113 = vector.load %arg21[%c128_73, %c0_74] : memref<144x256xf32, #tpu.memory_space<vmem>>, vector<16x256xf32>
    tpu.vector_store %arg21[%c128_73, %c0_74], %112 {strides = array<i32>} : memref<144x256xf32, #tpu.memory_space<vmem>>, vector<16x256xf32>,
    %c0_75 = arith.constant 0 : index
    %c0_76 = arith.constant 0 : index
    %114 = vector.load %arg12[%c0_75, %c0_76] : memref<16x144xf32, #tpu.memory_space<vmem>>, vector<16x144xf32>
    %c0_77 = arith.constant 0 : index
    %c0_78 = arith.constant 0 : index
    %115 = vector.load %arg21[%c0_77, %c0_78] : memref<144x256xf32, #tpu.memory_space<vmem>>, vector<144x256xf32>
    %cst_79 = arith.constant dense<0.000000e+00> : vector<16x256xf32>
    %116 = tpu.matmul %114, %115, %cst_79 {dimension_numbers = #tpu.dot_dimension_numbers<[1], [0], [0], [1], [0, 0, 1, 1], [], []>} : vector<16x144xf32>, vector<144x256xf32>, vector<16x256xf32> -> vector<16x256xf32>
    %117 = vector.extract_strided_slice %116 {offsets = [8, 0], sizes = [8, 256], strides = [1, 1]} : vector<16x256xf32> to vector<8x256xf32>
    %c0_80 = arith.constant 0 : index
    %c0_81 = arith.constant 0 : index
    %118 = vector.load %arg14[%c0_80, %c0_81] : memref<8x1xf32, #tpu.memory_space<vmem>>, vector<8x1xf32>
    %119 = vector.broadcast %118 : vector<8x1xf32> to vector<8x256xf32>
    %120 = arith.addf %117, %119 : vector<8x256xf32>
    %121 = vector.extract_strided_slice %116 {offsets = [0, 0], sizes = [8, 256], strides = [1, 1]} : vector<16x256xf32> to vector<8x256xf32>
    %c0_82 = arith.constant 0 : index
    %c0_83 = arith.constant 0 : index
    %122 = vector.load %arg13[%c0_82, %c0_83] : memref<8x1xf32, #tpu.memory_space<vmem>>, vector<8x1xf32>
    %123 = vector.broadcast %122 : vector<8x1xf32> to vector<8x256xf32>
    %124 = arith.addf %121, %123 : vector<8x256xf32>
    %cst_84 = arith.constant 0.000000e+00 : f32
    %125 = vector.broadcast %cst_84 : f32 to vector<8x256xf32>
    %126 = arith.maximumf %124, %125 : vector<8x256xf32>
    %127 = arith.addf %126, %120 : vector<8x256xf32>
    %cst_85 = arith.constant 0.000000e+00 : f32
    %128 = vector.broadcast %cst_85 : f32 to vector<8x128xf32>
    %c0_86 = arith.constant 0 : index
    %c0_87 = arith.constant 0 : index
    %129 = vector.load %arg20[%c0_86, %c0_87] : memref<8x512xf32, #tpu.memory_space<vmem>>, vector<8x128xf32>
    tpu.vector_store %arg20[%c0_86, %c0_87], %128 {strides = array<i32>} : memref<8x512xf32, #tpu.memory_space<vmem>>, vector<8x128xf32>,
    %cst_88 = arith.constant 0.000000e+00 : f32
    %130 = vector.broadcast %cst_88 : f32 to vector<8x128xf32>
    %c0_89 = arith.constant 0 : index
    %c384_90 = arith.constant 384 : index
    %131 = vector.load %arg20[%c0_89, %c384_90] : memref<8x512xf32, #tpu.memory_space<vmem>>, vector<8x128xf32>
    tpu.vector_store %arg20[%c0_89, %c384_90], %130 {strides = array<i32>} : memref<8x512xf32, #tpu.memory_space<vmem>>, vector<8x128xf32>,
    %c0_91 = arith.constant 0 : index
    %c128_92 = arith.constant 128 : index
    %132 = vector.load %arg20[%c0_91, %c128_92] : memref<8x512xf32, #tpu.memory_space<vmem>>, vector<8x256xf32>
    tpu.vector_store %arg20[%c0_91, %c128_92], %127 {strides = array<i32>} : memref<8x512xf32, #tpu.memory_space<vmem>>, vector<8x256xf32>,
    %c0_93 = arith.constant 0 : index
    %c111_94 = arith.constant 111 : index
    %133 = vector.load %arg20[%c0_93, %c111_94] : memref<8x512xf32, #tpu.memory_space<vmem>>, vector<8x256xf32>
    %134 = vector.broadcast %73 : vector<1x256xf32> to vector<8x256xf32>
    %135 = arith.mulf %133, %134 : vector<8x256xf32>
    %c0_95 = arith.constant 0 : index
    %c0_96 = arith.constant 0 : index
    %136 = vector.load %arg22[%c0_95, %c0_96] : memref<72x256xf32, #tpu.memory_space<vmem>>, vector<8x256xf32>
    tpu.vector_store %arg22[%c0_95, %c0_96], %135 {strides = array<i32>} : memref<72x256xf32, #tpu.memory_space<vmem>>, vector<8x256xf32>,
    %c0_97 = arith.constant 0 : index
    %c112_98 = arith.constant 112 : index
    %137 = vector.load %arg20[%c0_97, %c112_98] : memref<8x512xf32, #tpu.memory_space<vmem>>, vector<8x256xf32>
    %c8_99 = arith.constant 8 : index
    %c0_100 = arith.constant 0 : index
    %138 = vector.load %arg22[%c8_99, %c0_100] : memref<72x256xf32, #tpu.memory_space<vmem>>, vector<8x256xf32>
    tpu.vector_store %arg22[%c8_99, %c0_100], %137 {strides = array<i32>} : memref<72x256xf32, #tpu.memory_space<vmem>>, vector<8x256xf32>,
    %c0_101 = arith.constant 0 : index
    %c113_102 = arith.constant 113 : index
    %139 = vector.load %arg20[%c0_101, %c113_102] : memref<8x512xf32, #tpu.memory_space<vmem>>, vector<8x256xf32>
    %140 = vector.broadcast %77 : vector<1x256xf32> to vector<8x256xf32>
    %141 = arith.mulf %139, %140 : vector<8x256xf32>
    %c16_103 = arith.constant 16 : index
    %c0_104 = arith.constant 0 : index
    %142 = vector.load %arg22[%c16_103, %c0_104] : memref<72x256xf32, #tpu.memory_space<vmem>>, vector<8x256xf32>
    tpu.vector_store %arg22[%c16_103, %c0_104], %141 {strides = array<i32>} : memref<72x256xf32, #tpu.memory_space<vmem>>, vector<8x256xf32>,
    %c0_105 = arith.constant 0 : index
    %c127_106 = arith.constant 127 : index
    %143 = vector.load %arg20[%c0_105, %c127_106] : memref<8x512xf32, #tpu.memory_space<vmem>>, vector<8x256xf32>
    %144 = vector.broadcast %73 : vector<1x256xf32> to vector<8x256xf32>
    %145 = arith.mulf %143, %144 : vector<8x256xf32>
    %c24_107 = arith.constant 24 : index
    %c0_108 = arith.constant 0 : index
    %146 = vector.load %arg22[%c24_107, %c0_108] : memref<72x256xf32, #tpu.memory_space<vmem>>, vector<8x256xf32>
    tpu.vector_store %arg22[%c24_107, %c0_108], %145 {strides = array<i32>} : memref<72x256xf32, #tpu.memory_space<vmem>>, vector<8x256xf32>,
    %c0_109 = arith.constant 0 : index
    %c128_110 = arith.constant 128 : index
    %147 = vector.load %arg20[%c0_109, %c128_110] : memref<8x512xf32, #tpu.memory_space<vmem>>, vector<8x256xf32>
    %c32_111 = arith.constant 32 : index
    %c0_112 = arith.constant 0 : index
    %148 = vector.load %arg22[%c32_111, %c0_112] : memref<72x256xf32, #tpu.memory_space<vmem>>, vector<8x256xf32>
    tpu.vector_store %arg22[%c32_111, %c0_112], %147 {strides = array<i32>} : memref<72x256xf32, #tpu.memory_space<vmem>>, vector<8x256xf32>,
    %c0_113 = arith.constant 0 : index
    %c129_114 = arith.constant 129 : index
    %149 = vector.load %arg20[%c0_113, %c129_114] : memref<8x512xf32, #tpu.memory_space<vmem>>, vector<8x256xf32>
    %150 = vector.broadcast %77 : vector<1x256xf32> to vector<8x256xf32>
    %151 = arith.mulf %149, %150 : vector<8x256xf32>
    %c40 = arith.constant 40 : index
    %c0_115 = arith.constant 0 : index
    %152 = vector.load %arg22[%c40, %c0_115] : memref<72x256xf32, #tpu.memory_space<vmem>>, vector<8x256xf32>
    tpu.vector_store %arg22[%c40, %c0_115], %151 {strides = array<i32>} : memref<72x256xf32, #tpu.memory_space<vmem>>, vector<8x256xf32>,
    %c0_116 = arith.constant 0 : index
    %c143_117 = arith.constant 143 : index
    %153 = vector.load %arg20[%c0_116, %c143_117] : memref<8x512xf32, #tpu.memory_space<vmem>>, vector<8x256xf32>
    %154 = vector.broadcast %73 : vector<1x256xf32> to vector<8x256xf32>
    %155 = arith.mulf %153, %154 : vector<8x256xf32>
    %c48_118 = arith.constant 48 : index
    %c0_119 = arith.constant 0 : index
    %156 = vector.load %arg22[%c48_118, %c0_119] : memref<72x256xf32, #tpu.memory_space<vmem>>, vector<8x256xf32>
    tpu.vector_store %arg22[%c48_118, %c0_119], %155 {strides = array<i32>} : memref<72x256xf32, #tpu.memory_space<vmem>>, vector<8x256xf32>,
    %c0_120 = arith.constant 0 : index
    %c144_121 = arith.constant 144 : index
    %157 = vector.load %arg20[%c0_120, %c144_121] : memref<8x512xf32, #tpu.memory_space<vmem>>, vector<8x256xf32>
    %c56 = arith.constant 56 : index
    %c0_122 = arith.constant 0 : index
    %158 = vector.load %arg22[%c56, %c0_122] : memref<72x256xf32, #tpu.memory_space<vmem>>, vector<8x256xf32>
    tpu.vector_store %arg22[%c56, %c0_122], %157 {strides = array<i32>} : memref<72x256xf32, #tpu.memory_space<vmem>>, vector<8x256xf32>,
    %c0_123 = arith.constant 0 : index
    %c145_124 = arith.constant 145 : index
    %159 = vector.load %arg20[%c0_123, %c145_124] : memref<8x512xf32, #tpu.memory_space<vmem>>, vector<8x256xf32>
    %160 = vector.broadcast %77 : vector<1x256xf32> to vector<8x256xf32>
    %161 = arith.mulf %159, %160 : vector<8x256xf32>
    %c64_125 = arith.constant 64 : index
    %c0_126 = arith.constant 0 : index
    %162 = vector.load %arg22[%c64_125, %c0_126] : memref<72x256xf32, #tpu.memory_space<vmem>>, vector<8x256xf32>
    tpu.vector_store %arg22[%c64_125, %c0_126], %161 {strides = array<i32>} : memref<72x256xf32, #tpu.memory_space<vmem>>, vector<8x256xf32>,
    %c0_127 = arith.constant 0 : index
    %c0_128 = arith.constant 0 : index
    %163 = vector.load %arg15[%c0_127, %c0_128] : memref<8x72xf32, #tpu.memory_space<vmem>>, vector<8x72xf32>
    %c0_129 = arith.constant 0 : index
    %c0_130 = arith.constant 0 : index
    %164 = vector.load %arg22[%c0_129, %c0_130] : memref<72x256xf32, #tpu.memory_space<vmem>>, vector<72x256xf32>
    %cst_131 = arith.constant dense<0.000000e+00> : vector<8x256xf32>
    %165 = tpu.matmul %163, %164, %cst_131 {dimension_numbers = #tpu.dot_dimension_numbers<[1], [0], [0], [1], [0, 0, 1, 1], [], []>} : vector<8x72xf32>, vector<72x256xf32>, vector<8x256xf32> -> vector<8x256xf32>
    %c0_132 = arith.constant 0 : index
    %c0_133 = arith.constant 0 : index
    %166 = vector.load %arg16[%c0_132, %c0_133] : memref<8x1xf32, #tpu.memory_space<vmem>>, vector<8x1xf32>
    %167 = vector.broadcast %166 : vector<8x1xf32> to vector<8x256xf32>
    %168 = arith.addf %165, %167 : vector<8x256xf32>
    %cst_134 = arith.constant 0.000000e+00 : f32
    %169 = vector.broadcast %cst_134 : f32 to vector<8x256xf32>
    %170 = arith.maximumf %168, %169 : vector<8x256xf32>
    %171 = arith.addf %170, %127 : vector<8x256xf32>
    %c0_135 = arith.constant 0 : index
    %c0_136 = arith.constant 0 : index
    %c0_137 = arith.constant 0 : index
    %172 = vector.load %arg17[%c0_135, %c0_136, %c0_137] : memref<1x8x256xf32, #tpu.memory_space<vmem>>, vector<1x8x256xf32>
    %173 = vector.shape_cast %172 : vector<1x8x256xf32> to vector<8x256xf32>
    %174 = vector.shape_cast %171 : vector<8x256xf32> to vector<1x8x256xf32>
    tpu.vector_store %arg17[%c0_135, %c0_136, %c0_137], %174 {strides = array<i32>} : memref<1x8x256xf32, #tpu.memory_space<vmem>>, vector<1x8x256xf32>,
    return
  }
  func.func @transform_0(%arg0: i32) -> (i32, i32, i32) {
    %c0_i32 = arith.constant 0 : i32
    %c0_i32_0 = arith.constant 0 : i32
    %c0_i32_1 = arith.constant 0 : i32
    return %arg0, %c0_i32, %c0_i32_0 : i32, i32, i32
  }
  func.func @transform_1(%arg0: i32) -> (i32, i32, i32) {
    %c0_i32 = arith.constant 0 : i32
    %c0_i32_0 = arith.constant 0 : i32
    %c0_i32_1 = arith.constant 0 : i32
    return %arg0, %c0_i32, %c0_i32_0 : i32, i32, i32
  }
  func.func @transform_2(%arg0: i32) -> (i32, i32) {
    %c0_i32 = arith.constant 0 : i32
    %c0_i32_0 = arith.constant 0 : i32
    %c0_i32_1 = arith.constant 0 : i32
    return %c0_i32, %c0_i32_0 : i32, i32
  }
  func.func @transform_3(%arg0: i32) -> (i32, i32) {
    %c0_i32 = arith.constant 0 : i32
    %c0_i32_0 = arith.constant 0 : i32
    %c0_i32_1 = arith.constant 0 : i32
    return %c0_i32, %c0_i32_0 : i32, i32
  }
  func.func @transform_4(%arg0: i32) -> (i32, i32) {
    %c0_i32 = arith.constant 0 : i32
    %c0_i32_0 = arith.constant 0 : i32
    %c0_i32_1 = arith.constant 0 : i32
    return %c0_i32, %c0_i32_0 : i32, i32
  }
  func.func @transform_5(%arg0: i32) -> (i32, i32) {
    %c0_i32 = arith.constant 0 : i32
    %c0_i32_0 = arith.constant 0 : i32
    %c0_i32_1 = arith.constant 0 : i32
    return %c0_i32, %c0_i32_0 : i32, i32
  }
  func.func @transform_6(%arg0: i32) -> (i32, i32) {
    %c0_i32 = arith.constant 0 : i32
    %c0_i32_0 = arith.constant 0 : i32
    %c0_i32_1 = arith.constant 0 : i32
    return %c0_i32, %c0_i32_0 : i32, i32
  }
  func.func @transform_7(%arg0: i32) -> (i32, i32) {
    %c0_i32 = arith.constant 0 : i32
    %c0_i32_0 = arith.constant 0 : i32
    %c0_i32_1 = arith.constant 0 : i32
    return %c0_i32, %c0_i32_0 : i32, i32
  }
  func.func @transform_8(%arg0: i32) -> (i32, i32) {
    %c0_i32 = arith.constant 0 : i32
    %c0_i32_0 = arith.constant 0 : i32
    %c0_i32_1 = arith.constant 0 : i32
    return %c0_i32, %c0_i32_0 : i32, i32
  }
  func.func @transform_9(%arg0: i32) -> (i32, i32) {
    %c0_i32 = arith.constant 0 : i32
    %c0_i32_0 = arith.constant 0 : i32
    %c0_i32_1 = arith.constant 0 : i32
    return %c0_i32, %c0_i32_0 : i32, i32
  }
  func.func @transform_10(%arg0: i32) -> (i32, i32) {
    %c0_i32 = arith.constant 0 : i32
    %c0_i32_0 = arith.constant 0 : i32
    %c0_i32_1 = arith.constant 0 : i32
    return %c0_i32, %c0_i32_0 : i32, i32
  }
  func.func @transform_11(%arg0: i32) -> (i32, i32) {
    %c0_i32 = arith.constant 0 : i32
    %c0_i32_0 = arith.constant 0 : i32
    %c0_i32_1 = arith.constant 0 : i32
    return %c0_i32, %c0_i32_0 : i32, i32
  }
  func.func @transform_12(%arg0: i32) -> (i32, i32) {
    %c0_i32 = arith.constant 0 : i32
    %c0_i32_0 = arith.constant 0 : i32
    %c0_i32_1 = arith.constant 0 : i32
    return %c0_i32, %c0_i32_0 : i32, i32
  }
  func.func @transform_13(%arg0: i32) -> (i32, i32) {
    %c0_i32 = arith.constant 0 : i32
    %c0_i32_0 = arith.constant 0 : i32
    %c0_i32_1 = arith.constant 0 : i32
    return %c0_i32, %c0_i32_0 : i32, i32
  }
  func.func @transform_14(%arg0: i32) -> (i32, i32) {
    %c0_i32 = arith.constant 0 : i32
    %c0_i32_0 = arith.constant 0 : i32
    %c0_i32_1 = arith.constant 0 : i32
    return %c0_i32, %c0_i32_0 : i32, i32
  }
  func.func @transform_15(%arg0: i32) -> (i32, i32) {
    %c0_i32 = arith.constant 0 : i32
    %c0_i32_0 = arith.constant 0 : i32
    %c0_i32_1 = arith.constant 0 : i32
    return %c0_i32, %c0_i32_0 : i32, i32
  }
  func.func @transform_16(%arg0: i32) -> (i32, i32, i32) {
    %c0_i32 = arith.constant 0 : i32
    %c0_i32_0 = arith.constant 0 : i32
    %c0_i32_1 = arith.constant 0 : i32
    return %arg0, %c0_i32, %c0_i32_0 : i32, i32, i32
  }
}

</mosaic_0001>

<llo_original>
// kernel: enhanced_decoder_block_pallas.1
$region0: #{enhanced_decoder_block_pallas.1}
  #allocation0 [shape = 'u32[]', space=smem, size = 0x4, offset = 0x4, fixed_abs, tag = 'smem constant byte address 0x4 - core index']
  #allocation1 [shape = 'u32[72,128]{1,0:T(1,128)}', space=vmem, size = 0x9000, scoped, tag = 'internal scratch']
  #allocation2 [shape = 'f32[32,256]{1,0:T(8,128)}', space=vmem, size = 0x8000, scoped, tag = 'scratch operand']
  #allocation3 [shape = 'f32[16,512]{1,0:T(8,128)}', space=vmem, size = 0x8000, scoped, tag = 'scratch operand']
  #allocation4 [shape = 'f32[8,512]{1,0:T(8,128)}', space=vmem, size = 0x4000, scoped, tag = 'scratch operand']
  #allocation5 [shape = 'f32[144,256]{1,0:T(8,128)}', space=vmem, size = 0x24000, scoped, tag = 'scratch operand']
  #allocation6 [shape = 'f32[72,256]{1,0:T(8,128)}', space=vmem, size = 0x12000, scoped, tag = 'scratch operand']
  #allocation7 [shape = 'f32[1,1]{1,0:T(1,128)S(1)}', space=vmem, size = 0x200, scoped, tag = 'scoped memory for enhanced_decoder_block_pallas.1']
  %s0 = inlined_call_operand.vmem [shape: f32[2,8,64], index: 0, kind: input, shape index: {}]
  %s1 = inlined_call_operand.vmem [shape: f32[2,8,256], index: 1, kind: input, shape index: {}]
  %s2 = inlined_call_operand.vmem [shape: f32[64,1280], index: 2, kind: input, shape index: {}]
  %s3 = inlined_call_operand.vmem [shape: f32[8,32], index: 3, kind: input, shape index: {}]
  %s4 = inlined_call_operand.vmem [shape: f32[8,1], index: 4, kind: input, shape index: {}]
  %s5 = inlined_call_operand.vmem [shape: f32[4,8], index: 5, kind: input, shape index: {}]
  %s6 = inlined_call_operand.vmem [shape: f32[4,1], index: 6, kind: input, shape index: {}]
  %s7 = inlined_call_operand.vmem [shape: f32[4,8], index: 7, kind: input, shape index: {}]
  %s8 = inlined_call_operand.vmem [shape: f32[4,1], index: 8, kind: input, shape index: {}]
  %s9 = inlined_call_operand.vmem [shape: f32[4,1], index: 9, kind: input, shape index: {}]
  %s10 = inlined_call_operand.<no memory space> [shape: f32[1,1], index: 10, kind: input, shape index: {}]
  %s11 = inlined_call_operand.vmem [shape: f32[16,144], index: 11, kind: input, shape index: {}]
  %s12 = inlined_call_operand.vmem [shape: f32[8,1], index: 12, kind: input, shape index: {}]
  %s13 = inlined_call_operand.vmem [shape: f32[8,1], index: 13, kind: input, shape index: {}]
  %s14 = inlined_call_operand.vmem [shape: f32[8,72], index: 14, kind: input, shape index: {}]
  %s15 = inlined_call_operand.vmem [shape: f32[8,1], index: 15, kind: input, shape index: {}]
  %s16 = inlined_call_operand.vmem [shape: f32[2,8,256], index: 16, kind: output, shape index: {}]
  %s17 = sld [smem:[#allocation0]]
  $region97: #{enhanced_decoder_block_pallas.1} parent=0
    _
  %s19 = ssub.s32 1, %s17
  %s20 = scalar_select 0, %s19, %s17
  %v21 = vstv %s10
  %22 = vst [vmem:[#allocation7] sm:$0x1] %v21
  loop: start=0, step=1, limit=4
  $region2: #{enhanced_decoder_block_pallas.1} parent=0 // loop_pre_header
    _
  $region3: #{enhanced_decoder_block_pallas.1} parent=0 // loop_header
    %s24 = sphi 0, %s28
    %p25 = scmp.ge.s32.totalorder %s24, 4
    %s34 = sphi 0, %s36
    %s37 = sphi 0, %s34
    %s38 = sphi 0, %s37
    %s54 = sphi 0, %s38
    %s60 = sphi 0, %s62
    %s63 = sphi 0, %s60
    %s64 = sphi 0, %s63
    %s80 = sphi 0, %s64
    %s84 = sphi 0, %s84
    %s86 = sphi 0, %s84
    %s87 = sphi 0, %s86
    %s101 = sphi 0, %s87
    %s105 = sphi 0, %s105
    %s107 = sphi 0, %s105
    %s108 = sphi 0, %s107
    %s122 = sphi 0, %s108
    %s126 = sphi 0, %s126
    %s128 = sphi 0, %s126
    %s129 = sphi 0, %s128
    %s143 = sphi 0, %s129
    %s147 = sphi 0, %s147
    %s149 = sphi 0, %s147
    %s150 = sphi 0, %s149
    %s164 = sphi 0, %s150
    %s168 = sphi 0, %s168
    %s170 = sphi 0, %s168
    %s171 = sphi 0, %s170
    %s185 = sphi 0, %s171
    %s189 = sphi 0, %s189
    %s191 = sphi 0, %s189
    %s192 = sphi 0, %s191
    %s206 = sphi 0, %s192
    %s210 = sphi 0, %s210
    %s212 = sphi 0, %s210
    %s213 = sphi 0, %s212
    %s227 = sphi 0, %s213
    %s231 = sphi 0, %s231
    %s233 = sphi 0, %s231
    %s234 = sphi 0, %s233
    %s248 = sphi 0, %s234
    %s252 = sphi 0, %s252
    %s254 = sphi 0, %s252
    %s255 = sphi 0, %s254
    %s269 = sphi 0, %s255
    %s273 = sphi 0, %s273
    %s275 = sphi 0, %s273
    %s276 = sphi 0, %s275
    %s290 = sphi 0, %s276
    %s294 = sphi 0, %s294
    %s296 = sphi 0, %s294
    %s297 = sphi 0, %s296
    %s311 = sphi 0, %s297
    %s315 = sphi 0, %s315
    %s317 = sphi 0, %s315
    %s318 = sphi 0, %s317
    %s332 = sphi 0, %s318
    %s336 = sphi 0, %s336
    %s338 = sphi 0, %s336
    %s339 = sphi 0, %s338
    %s353 = sphi 0, %s339
    %s357 = sphi 0, %s357
    %s359 = sphi 0, %s357
    %s360 = sphi 0, %s359
    %s374 = sphi 0, %s360
    %s380 = sphi 0, %s382
    %s383 = sphi 0, %s380
    %s384 = sphi 0, %s383
    %s400 = sphi 0, %s384
  $region4: #{enhanced_decoder_block_pallas.1} parent=0 // loop_header_branch
    %27 = sbr.rel (%p25) target = $region8
  $region5: #{enhanced_decoder_block_pallas.1} parent=0 // loop_body
    %s29 = ssub.s32 %s24, 1
    %s30 = ssub.s32 %s24, 2
    %s31 = sadd.s32 %s24, 1
    %s32 = ssub.s32 %s24, %s31
    %p33 = scmp.eq.s32.totalorder %s32, 0
    %s35 = sadd.s32 %s34, 1
    %s36 = scalar_select %p33, %s34, %s35
    %p39 = pneg %p33
    %p40 = scmp.eq.s32.totalorder %s24, 1
    %p41 = por %p39, %p40
    %p42 = scmp.ne.s32.totalorder %s34, %s37
    %p43 = scmp.eq.s32.totalorder %s24, 0
    %p44 = por %p42, %p43
    %p45 = scmp.ne.s32.totalorder %s34, %s37
    %p46 = scmp.eq.s32.totalorder %s29, 1
    %p47 = por %p45, %p46
    %p48 = scmp.ne.s32.totalorder %s37, %s38
    %p49 = scmp.eq.s32.totalorder %s29, 0
    %p50 = por %p48, %p49
    %p51 = scmp.ne.s32.totalorder %s37, %s38
    %p52 = scmp.eq.s32.totalorder %s30, 1
    %p53 = por %p51, %p52
    %p55 = scmp.ne.s32.totalorder %s38, %s54
    %p56 = scmp.eq.s32.totalorder %s30, 0
    %p57 = por %p55, %p56
    %s58 = ssub.s32 %s24, %s31
    %p59 = scmp.eq.s32.totalorder %s58, 0
    %s61 = sadd.s32 %s60, 1
    %s62 = scalar_select %p59, %s60, %s61
    %p65 = pneg %p59
    %p66 = scmp.eq.s32.totalorder %s24, 1
    %p67 = por %p65, %p66
    %p68 = scmp.ne.s32.totalorder %s60, %s63
    %p69 = scmp.eq.s32.totalorder %s24, 0
    %p70 = por %p68, %p69
    %p71 = scmp.ne.s32.totalorder %s60, %s63
    %p72 = scmp.eq.s32.totalorder %s29, 1
    %p73 = por %p71, %p72
    %p74 = scmp.ne.s32.totalorder %s63, %s64
    %p75 = scmp.eq.s32.totalorder %s29, 0
    %p76 = por %p74, %p75
    %p77 = scmp.ne.s32.totalorder %s63, %s64
    %p78 = scmp.eq.s32.totalorder %s30, 1
    %p79 = por %p77, %p78
    %p81 = scmp.ne.s32.totalorder %s64, %s80
    %p82 = scmp.eq.s32.totalorder %s30, 0
    %p83 = por %p81, %p82
    %s85 = sadd.s32 %s84, 1
    %p88 = scmp.eq.s32.totalorder %s24, 1
    %p89 = scmp.ne.s32.totalorder %s84, %s86
    %p90 = scmp.eq.s32.totalorder %s24, 0
    %p91 = por %p89, %p90
    %p92 = scmp.ne.s32.totalorder %s84, %s86
    %p93 = scmp.eq.s32.totalorder %s29, 1
    %p94 = por %p92, %p93
    %p95 = scmp.ne.s32.totalorder %s86, %s87
    %p96 = scmp.eq.s32.totalorder %s29, 0
    %p97 = por %p95, %p96
    %p98 = scmp.ne.s32.totalorder %s86, %s87
    %p99 = scmp.eq.s32.totalorder %s30, 1
    %p100 = por %p98, %p99
    %p102 = scmp.ne.s32.totalorder %s87, %s101
    %p103 = scmp.eq.s32.totalorder %s30, 0
    %p104 = por %p102, %p103
    %s106 = sadd.s32 %s105, 1
    %p109 = scmp.eq.s32.totalorder %s24, 1
    %p110 = scmp.ne.s32.totalorder %s105, %s107
    %p111 = scmp.eq.s32.totalorder %s24, 0
    %p112 = por %p110, %p111
    %p113 = scmp.ne.s32.totalorder %s105, %s107
    %p114 = scmp.eq.s32.totalorder %s29, 1
    %p115 = por %p113, %p114
    %p116 = scmp.ne.s32.totalorder %s107, %s108
    %p117 = scmp.eq.s32.totalorder %s29, 0
    %p118 = por %p116, %p117
    %p119 = scmp.ne.s32.totalorder %s107, %s108
    %p120 = scmp.eq.s32.totalorder %s30, 1
    %p121 = por %p119, %p120
    %p123 = scmp.ne.s32.totalorder %s108, %s122
    %p124 = scmp.eq.s32.totalorder %s30, 0
    %p125 = por %p123, %p124
    %s127 = sadd.s32 %s126, 1
    %p130 = scmp.eq.s32.totalorder %s24, 1
    %p131 = scmp.ne.s32.totalorder %s126, %s128
    %p132 = scmp.eq.s32.totalorder %s24, 0
    %p133 = por %p131, %p132
    %p134 = scmp.ne.s32.totalorder %s126, %s128
    %p135 = scmp.eq.s32.totalorder %s29, 1
    %p136 = por %p134, %p135
    %p137 = scmp.ne.s32.totalorder %s128, %s129
    %p138 = scmp.eq.s32.totalorder %s29, 0
    %p139 = por %p137, %p138
    %p140 = scmp.ne.s32.totalorder %s128, %s129
    %p141 = scmp.eq.s32.totalorder %s30, 1
    %p142 = por %p140, %p141
    %p144 = scmp.ne.s32.totalorder %s129, %s143
    %p145 = scmp.eq.s32.totalorder %s30, 0
    %p146 = por %p144, %p145
    %s148 = sadd.s32 %s147, 1
    %p151 = scmp.eq.s32.totalorder %s24, 1
    %p152 = scmp.ne.s32.totalorder %s147, %s149
    %p153 = scmp.eq.s32.totalorder %s24, 0
    %p154 = por %p152, %p153
    %p155 = scmp.ne.s32.totalorder %s147, %s149
    %p156 = scmp.eq.s32.totalorder %s29, 1
    %p157 = por %p155, %p156
    %p158 = scmp.ne.s32.totalorder %s149, %s150
    %p159 = scmp.eq.s32.totalorder %s29, 0
    %p160 = por %p158, %p159
    %p161 = scmp.ne.s32.totalorder %s149, %s150
    %p162 = scmp.eq.s32.totalorder %s30, 1
    %p163 = por %p161, %p162
    %p165 = scmp.ne.s32.totalorder %s150, %s164
    %p166 = scmp.eq.s32.totalorder %s30, 0
    %p167 = por %p165, %p166
    %s169 = sadd.s32 %s168, 1
    %p172 = scmp.eq.s32.totalorder %s24, 1
    %p173 = scmp.ne.s32.totalorder %s168, %s170
    %p174 = scmp.eq.s32.totalorder %s24, 0
    %p175 = por %p173, %p174
    %p176 = scmp.ne.s32.totalorder %s168, %s170
    %p177 = scmp.eq.s32.totalorder %s29, 1
    %p178 = por %p176, %p177
    %p179 = scmp.ne.s32.totalorder %s170, %s171
    %p180 = scmp.eq.s32.totalorder %s29, 0
    %p181 = por %p179, %p180
    %p182 = scmp.ne.s32.totalorder %s170, %s171
    %p183 = scmp.eq.s32.totalorder %s30, 1
    %p184 = por %p182, %p183
    %p186 = scmp.ne.s32.totalorder %s171, %s185
    %p187 = scmp.eq.s32.totalorder %s30, 0
    %p188 = por %p186, %p187
    %s190 = sadd.s32 %s189, 1
    %p193 = scmp.eq.s32.totalorder %s24, 1
    %p194 = scmp.ne.s32.totalorder %s189, %s191
    %p195 = scmp.eq.s32.totalorder %s24, 0
    %p196 = por %p194, %p195
    %p197 = scmp.ne.s32.totalorder %s189, %s191
    %p198 = scmp.eq.s32.totalorder %s29, 1
    %p199 = por %p197, %p198
    %p200 = scmp.ne.s32.totalorder %s191, %s192
    %p201 = scmp.eq.s32.totalorder %s29, 0
    %p202 = por %p200, %p201
    %p203 = scmp.ne.s32.totalorder %s191, %s192
    %p204 = scmp.eq.s32.totalorder %s30, 1
    %p205 = por %p203, %p204
    %p207 = scmp.ne.s32.totalorder %s192, %s206
    %p208 = scmp.eq.s32.totalorder %s30, 0
    %p209 = por %p207, %p208
    %s211 = sadd.s32 %s210, 1
    %p214 = scmp.eq.s32.totalorder %s24, 1
    %p215 = scmp.ne.s32.totalorder %s210, %s212
    %p216 = scmp.eq.s32.totalorder %s24, 0
    %p217 = por %p215, %p216
    %p218 = scmp.ne.s32.totalorder %s210, %s212
    %p219 = scmp.eq.s32.totalorder %s29, 1
    %p220 = por %p218, %p219
    %p221 = scmp.ne.s32.totalorder %s212, %s213
    %p222 = scmp.eq.s32.totalorder %s29, 0
    %p223 = por %p221, %p222
    %p224 = scmp.ne.s32.totalorder %s212, %s213
    %p225 = scmp.eq.s32.totalorder %s30, 1
    %p226 = por %p224, %p225
    %p228 = scmp.ne.s32.totalorder %s213, %s227
    %p229 = scmp.eq.s32.totalorder %s30, 0
    %p230 = por %p228, %p229
    %s232 = sadd.s32 %s231, 1
    %p235 = scmp.eq.s32.totalorder %s24, 1
    %p236 = scmp.ne.s32.totalorder %s231, %s233
    %p237 = scmp.eq.s32.totalorder %s24, 0
    %p238 = por %p236, %p237
    %p239 = scmp.ne.s32.totalorder %s231, %s233
    %p240 = scmp.eq.s32.totalorder %s29, 1
    %p241 = por %p239, %p240
    %p242 = scmp.ne.s32.totalorder %s233, %s234
    %p243 = scmp.eq.s32.totalorder %s29, 0
    %p244 = por %p242, %p243
    %p245 = scmp.ne.s32.totalorder %s233, %s234
    %p246 = scmp.eq.s32.totalorder %s30, 1
    %p247 = por %p245, %p246
    %p249 = scmp.ne.s32.totalorder %s234, %s248
    %p250 = scmp.eq.s32.totalorder %s30, 0
    %p251 = por %p249, %p250
    %s253 = sadd.s32 %s252, 1
    %p256 = scmp.eq.s32.totalorder %s24, 1
    %p257 = scmp.ne.s32.totalorder %s252, %s254
    %p258 = scmp.eq.s32.totalorder %s24, 0
    %p259 = por %p257, %p258
    %p260 = scmp.ne.s32.totalorder %s252, %s254
    %p261 = scmp.eq.s32.totalorder %s29, 1
    %p262 = por %p260, %p261
    %p263 = scmp.ne.s32.totalorder %s254, %s255
    %p264 = scmp.eq.s32.totalorder %s29, 0
    %p265 = por %p263, %p264
    %p266 = scmp.ne.s32.totalorder %s254, %s255
    %p267 = scmp.eq.s32.totalorder %s30, 1
    %p268 = por %p266, %p267
    %p270 = scmp.ne.s32.totalorder %s255, %s269
    %p271 = scmp.eq.s32.totalorder %s30, 0
    %p272 = por %p270, %p271
    %s274 = sadd.s32 %s273, 1
    %p277 = scmp.eq.s32.totalorder %s24, 1
    %p278 = scmp.ne.s32.totalorder %s273, %s275
    %p279 = scmp.eq.s32.totalorder %s24, 0
    %p280 = por %p278, %p279
    %p281 = scmp.ne.s32.totalorder %s273, %s275
    %p282 = scmp.eq.s32.totalorder %s29, 1
    %p283 = por %p281, %p282
    %p284 = scmp.ne.s32.totalorder %s275, %s276
    %p285 = scmp.eq.s32.totalorder %s29, 0
    %p286 = por %p284, %p285
    %p287 = scmp.ne.s32.totalorder %s275, %s276
    %p288 = scmp.eq.s32.totalorder %s30, 1
    %p289 = por %p287, %p288
    %p291 = scmp.ne.s32.totalorder %s276, %s290
    %p292 = scmp.eq.s32.totalorder %s30, 0
    %p293 = por %p291, %p292
    %s295 = sadd.s32 %s294, 1
    %p298 = scmp.eq.s32.totalorder %s24, 1
    %p299 = scmp.ne.s32.totalorder %s294, %s296
    %p300 = scmp.eq.s32.totalorder %s24, 0
    %p301 = por %p299, %p300
    %p302 = scmp.ne.s32.totalorder %s294, %s296
    %p303 = scmp.eq.s32.totalorder %s29, 1
    %p304 = por %p302, %p303
    %p305 = scmp.ne.s32.totalorder %s296, %s297
    %p306 = scmp.eq.s32.totalorder %s29, 0
    %p307 = por %p305, %p306
    %p308 = scmp.ne.s32.totalorder %s296, %s297
    %p309 = scmp.eq.s32.totalorder %s30, 1
    %p310 = por %p308, %p309
    %p312 = scmp.ne.s32.totalorder %s297, %s311
    %p313 = scmp.eq.s32.totalorder %s30, 0
    %p314 = por %p312, %p313
    %s316 = sadd.s32 %s315, 1
    %p319 = scmp.eq.s32.totalorder %s24, 1
    %p320 = scmp.ne.s32.totalorder %s315, %s317
    %p321 = scmp.eq.s32.totalorder %s24, 0
    %p322 = por %p320, %p321
    %p323 = scmp.ne.s32.totalorder %s315, %s317
    %p324 = scmp.eq.s32.totalorder %s29, 1
    %p325 = por %p323, %p324
    %p326 = scmp.ne.s32.totalorder %s317, %s318
    %p327 = scmp.eq.s32.totalorder %s29, 0
    %p328 = por %p326, %p327
    %p329 = scmp.ne.s32.totalorder %s317, %s318
    %p330 = scmp.eq.s32.totalorder %s30, 1
    %p331 = por %p329, %p330
    %p333 = scmp.ne.s32.totalorder %s318, %s332
    %p334 = scmp.eq.s32.totalorder %s30, 0
    %p335 = por %p333, %p334
    %s337 = sadd.s32 %s336, 1
    %p340 = scmp.eq.s32.totalorder %s24, 1
    %p341 = scmp.ne.s32.totalorder %s336, %s338
    %p342 = scmp.eq.s32.totalorder %s24, 0
    %p343 = por %p341, %p342
    %p344 = scmp.ne.s32.totalorder %s336, %s338
    %p345 = scmp.eq.s32.totalorder %s29, 1
    %p346 = por %p344, %p345
    %p347 = scmp.ne.s32.totalorder %s338, %s339
    %p348 = scmp.eq.s32.totalorder %s29, 0
    %p349 = por %p347, %p348
    %p350 = scmp.ne.s32.totalorder %s338, %s339
    %p351 = scmp.eq.s32.totalorder %s30, 1
    %p352 = por %p350, %p351
    %p354 = scmp.ne.s32.totalorder %s339, %s353
    %p355 = scmp.eq.s32.totalorder %s30, 0
    %p356 = por %p354, %p355
    %s358 = sadd.s32 %s357, 1
    %p361 = scmp.eq.s32.totalorder %s24, 1
    %p362 = scmp.ne.s32.totalorder %s357, %s359
    %p363 = scmp.eq.s32.totalorder %s24, 0
    %p364 = por %p362, %p363
    %p365 = scmp.ne.s32.totalorder %s357, %s359
    %p366 = scmp.eq.s32.totalorder %s29, 1
    %p367 = por %p365, %p366
    %p368 = scmp.ne.s32.totalorder %s359, %s360
    %p369 = scmp.eq.s32.totalorder %s29, 0
    %p370 = por %p368, %p369
    %p371 = scmp.ne.s32.totalorder %s359, %s360
    %p372 = scmp.eq.s32.totalorder %s30, 1
    %p373 = por %p371, %p372
    %p375 = scmp.ne.s32.totalorder %s360, %s374
    %p376 = scmp.eq.s32.totalorder %s30, 0
    %p377 = por %p375, %p376
    %s378 = ssub.s32 %s24, %s31
    %p379 = scmp.eq.s32.totalorder %s378, 0
    %s381 = sadd.s32 %s380, 1
    %s382 = scalar_select %p379, %s380, %s381
    %p385 = pneg %p379
    %p386 = scmp.eq.s32.totalorder %s24, 1
    %p387 = por %p385, %p386
    %p388 = scmp.ne.s32.totalorder %s380, %s383
    %p389 = scmp.eq.s32.totalorder %s24, 0
    %p390 = por %p388, %p389
    %p391 = scmp.ne.s32.totalorder %s380, %s383
    %p392 = scmp.eq.s32.totalorder %s29, 1
    %p393 = por %p391, %p392
    %p394 = scmp.ne.s32.totalorder %s383, %s384
    %p395 = scmp.eq.s32.totalorder %s29, 0
    %p396 = por %p394, %p395
    %p397 = scmp.ne.s32.totalorder %s383, %s384
    %p398 = scmp.eq.s32.totalorder %s30, 1
    %p399 = por %p397, %p398
    %p401 = scmp.ne.s32.totalorder %s384, %s400
    %p402 = scmp.eq.s32.totalorder %s30, 0
    %p403 = por %p401, %p402
    %p404 = scmp.le.s32.totalorder 1, %s24
    %p405 = scmp.lt.s32.totalorder %s24, 3
    %p406 = pnand %p404, %p405
    %p407 = pneg %p406
    // Predicated region
    $region9: #{enhanced_decoder_block_pallas.1} parent=5 // pred_check
      _
    $region10: #{enhanced_decoder_block_pallas.1} parent=5 // pred_check_branch
      %409 = sbr.rel (%p406) target = $region12
    $region11: #{enhanced_decoder_block_pallas.1} parent=5 // pred_region
      %s410 = ssub.s32 %s24, 1
      // Predicated region
      $region13: #{enhanced_decoder_block_pallas.1} parent=11 // pred_check
        %p411 = pneg %p97
      $region14: #{enhanced_decoder_block_pallas.1} parent=11 // pred_check_branch
        %413 = sbr.rel (%p411) target = $region16
      $region15: #{enhanced_decoder_block_pallas.1} parent=11 // pred_region
        _
      $region16: #{enhanced_decoder_block_pallas.1} parent=11 // pred_fallthru
        _
      // Predicated region
      $region17: #{enhanced_decoder_block_pallas.1} parent=11 // pred_check
        %p414 = pneg %p118
      $region18: #{enhanced_decoder_block_pallas.1} parent=11 // pred_check_branch
        %416 = sbr.rel (%p414) target = $region20
      $region19: #{enhanced_decoder_block_pallas.1} parent=11 // pred_region
        _
      $region20: #{enhanced_decoder_block_pallas.1} parent=11 // pred_fallthru
        _
      // Predicated region
      $region21: #{enhanced_decoder_block_pallas.1} parent=11 // pred_check
        %p417 = pneg %p139
      $region22: #{enhanced_decoder_block_pallas.1} parent=11 // pred_check_branch
        %419 = sbr.rel (%p417) target = $region24
      $region23: #{enhanced_decoder_block_pallas.1} parent=11 // pred_region
        _
      $region24: #{enhanced_decoder_block_pallas.1} parent=11 // pred_fallthru
        _
      // Predicated region
      $region25: #{enhanced_decoder_block_pallas.1} parent=11 // pred_check
        %p420 = pneg %p160
      $region26: #{enhanced_decoder_block_pallas.1} parent=11 // pred_check_branch
        %422 = sbr.rel (%p420) target = $region28
      $region27: #{enhanced_decoder_block_pallas.1} parent=11 // pred_region
        _
      $region28: #{enhanced_decoder_block_pallas.1} parent=11 // pred_fallthru
        _
      // Predicated region
      $region29: #{enhanced_decoder_block_pallas.1} parent=11 // pred_check
        %p423 = pneg %p181
      $region30: #{enhanced_decoder_block_pallas.1} parent=11 // pred_check_branch
        %425 = sbr.rel (%p423) target = $region32
      $region31: #{enhanced_decoder_block_pallas.1} parent=11 // pred_region
        _
      $region32: #{enhanced_decoder_block_pallas.1} parent=11 // pred_fallthru
        _
      // Predicated region
      $region33: #{enhanced_decoder_block_pallas.1} parent=11 // pred_check
        %p426 = pneg %p202
      $region34: #{enhanced_decoder_block_pallas.1} parent=11 // pred_check_branch
        %428 = sbr.rel (%p426) target = $region36
      $region35: #{enhanced_decoder_block_pallas.1} parent=11 // pred_region
        _
      $region36: #{enhanced_decoder_block_pallas.1} parent=11 // pred_fallthru
        _
      // Predicated region
      $region37: #{enhanced_decoder_block_pallas.1} parent=11 // pred_check
        %p429 = pneg %p223
      $region38: #{enhanced_decoder_block_pallas.1} parent=11 // pred_check_branch
        %431 = sbr.rel (%p429) target = $region40
      $region39: #{enhanced_decoder_block_pallas.1} parent=11 // pred_region
        _
      $region40: #{enhanced_decoder_block_pallas.1} parent=11 // pred_fallthru
        _
      // Predicated region
      $region41: #{enhanced_decoder_block_pallas.1} parent=11 // pred_check
        %p432 = pneg %p244
      $region42: #{enhanced_decoder_block_pallas.1} parent=11 // pred_check_branch
        %434 = sbr.rel (%p432) target = $region44
      $region43: #{enhanced_decoder_block_pallas.1} parent=11 // pred_region
        _
      $region44: #{enhanced_decoder_block_pallas.1} parent=11 // pred_fallthru
        _
      // Predicated region
      $region45: #{enhanced_decoder_block_pallas.1} parent=11 // pred_check
        %p435 = pneg %p265
      $region46: #{enhanced_decoder_block_pallas.1} parent=11 // pred_check_branch
        %437 = sbr.rel (%p435) target = $region48
      $region47: #{enhanced_decoder_block_pallas.1} parent=11 // pred_region
        _
      $region48: #{enhanced_decoder_block_pallas.1} parent=11 // pred_fallthru
        _
      // Predicated region
      $region49: #{enhanced_decoder_block_pallas.1} parent=11 // pred_check
        %p438 = pneg %p286
      $region50: #{enhanced_decoder_block_pallas.1} parent=11 // pred_check_branch
        %440 = sbr.rel (%p438) target = $region52
      $region51: #{enhanced_decoder_block_pallas.1} parent=11 // pred_region
        _
      $region52: #{enhanced_decoder_block_pallas.1} parent=11 // pred_fallthru
        _
      // Predicated region
      $region53: #{enhanced_decoder_block_pallas.1} parent=11 // pred_check
        %p441 = pneg %p307
      $region54: #{enhanced_decoder_block_pallas.1} parent=11 // pred_check_branch
        %443 = sbr.rel (%p441) target = $region56
      $region55: #{enhanced_decoder_block_pallas.1} parent=11 // pred_region
        _
      $region56: #{enhanced_decoder_block_pallas.1} parent=11 // pred_fallthru
        _
      // Predicated region
      $region57: #{enhanced_decoder_block_pallas.1} parent=11 // pred_check
        %p444 = pneg %p328
      $region58: #{enhanced_decoder_block_pallas.1} parent=11 // pred_check_branch
        %446 = sbr.rel (%p444) target = $region60
      $region59: #{enhanced_decoder_block_pallas.1} parent=11 // pred_region
        _
      $region60: #{enhanced_decoder_block_pallas.1} parent=11 // pred_fallthru
        _
      // Predicated region
      $region61: #{enhanced_decoder_block_pallas.1} parent=11 // pred_check
        %p447 = pneg %p349
      $region62: #{enhanced_decoder_block_pallas.1} parent=11 // pred_check_branch
        %449 = sbr.rel (%p447) target = $region64
      $region63: #{enhanced_decoder_block_pallas.1} parent=11 // pred_region
        _
      $region64: #{enhanced_decoder_block_pallas.1} parent=11 // pred_fallthru
        _
      // Predicated region
      $region65: #{enhanced_decoder_block_pallas.1} parent=11 // pred_check
        %p450 = pneg %p370
      $region66: #{enhanced_decoder_block_pallas.1} parent=11 // pred_check_branch
        %452 = sbr.rel (%p450) target = $region68
      $region67: #{enhanced_decoder_block_pallas.1} parent=11 // pred_region
        _
      $region68: #{enhanced_decoder_block_pallas.1} parent=11 // pred_fallthru
        _
    $region12: #{enhanced_decoder_block_pallas.1} parent=5 // pred_fallthru
      _
    %p453 = scmp.lt.s32.totalorder %s24, 2
    // Predicated region
    $region69: #{enhanced_decoder_block_pallas.1} parent=5 // pred_check
      %p454 = pneg %p453
    $region70: #{enhanced_decoder_block_pallas.1} parent=5 // pred_check_branch
      %456 = sbr.rel (%p454) target = $region72
    $region71: #{enhanced_decoder_block_pallas.1} parent=5 // pred_region
      // Predicated region
      $region73: #{enhanced_decoder_block_pallas.1} parent=71 // pred_check
        %p457 = pneg %p44
      $region74: #{enhanced_decoder_block_pallas.1} parent=71 // pred_check_branch
        %459 = sbr.rel (%p457) target = $region76
      $region75: #{enhanced_decoder_block_pallas.1} parent=71 // pred_region
        %p460 = scmp.lt.s32.totalorder %s24, 1
        %s461 = scalar_select %p460, %s24, 1
        %s462 = smul.addr %s461, 8
        %s463 = scalar_lea.vmem %s0, %s462
      $region76: #{enhanced_decoder_block_pallas.1} parent=71 // pred_fallthru
        _
      // Predicated region
      $region77: #{enhanced_decoder_block_pallas.1} parent=71 // pred_check
        %p464 = pneg %p70
      $region78: #{enhanced_decoder_block_pallas.1} parent=71 // pred_check_branch
        %466 = sbr.rel (%p464) target = $region80
      $region79: #{enhanced_decoder_block_pallas.1} parent=71 // pred_region
        %p467 = scmp.lt.s32.totalorder %s24, 1
        %s468 = scalar_select %p467, %s24, 1
        %s469 = smul.addr %s468, 2
        %s470 = smul.addr %s469, 8
        %s471 = scalar_lea.vmem %s1, %s470
      $region80: #{enhanced_decoder_block_pallas.1} parent=71 // pred_fallthru
        _
    $region72: #{enhanced_decoder_block_pallas.1} parent=5 // pred_fallthru
      _
    %p472 = scmp.le.s32.totalorder 1, %s24
    %p473 = scmp.lt.s32.totalorder %s24, 3
    %p474 = pnand %p472, %p473
    %p475 = pneg %p474
    // Predicated region
    $region81: #{enhanced_decoder_block_pallas.1} parent=5 // pred_check
      _
    $region82: #{enhanced_decoder_block_pallas.1} parent=5 // pred_check_branch
      %477 = sbr.rel (%p474) target = $region84
    $region83: #{enhanced_decoder_block_pallas.1} parent=5 // pred_region
      %s478 = ssub.s32 %s24, 1
      %p479 = scmp.lt.s32.totalorder %s29, 1
      %s480 = scalar_select %p479, %s29, 1
      %s481 = smul.addr %s480, 8
      %s482 = scalar_lea.vmem %s0, %s481
      %p483 = pneg %p50
      %p484 = pneg %p47
      %p485 = scmp.lt.s32.totalorder %s29, 1
      %s486 = scalar_select %p485, %s29, 1
      %s487 = smul.addr %s486, 2
      %s488 = smul.addr %s487, 8
      %s489 = scalar_lea.vmem %s1, %s488
      %p490 = pneg %p76
      %p491 = pneg %p73
      %p492 = pneg %p97
      %p493 = pneg %p94
      %p494 = pneg %p118
      %p495 = pneg %p115
      %p496 = pneg %p139
      %p497 = pneg %p136
      %p498 = pneg %p160
      %p499 = pneg %p157
      %p500 = pneg %p181
      %p501 = pneg %p178
      %p502 = pneg %p202
      %p503 = pneg %p199
      %p504 = pneg %p223
      %p505 = pneg %p220
      %p506 = pneg %p244
      %p507 = pneg %p241
      %p508 = pneg %p265
      %p509 = pneg %p262
      %p510 = pneg %p286
      %p511 = pneg %p283
      %p512 = pneg %p307
      %p513 = pneg %p304
      %p514 = pneg %p328
      %p515 = pneg %p325
      %p516 = pneg %p349
      %p517 = pneg %p346
      %p518 = pneg %p370
      %p519 = pneg %p367
      %p520 = pneg %p396
      %p521 = pneg %p393
      %p522 = scmp.lt.s32.totalorder %s29, 1
      %s523 = scalar_select %p522, %s29, 1
      %s524 = smul.addr %s523, 2
      %s525 = smul.addr %s524, 8
      %s526 = scalar_lea.vmem %s16, %s525
      %p527 = scmp.lt.s32.totalorder %s29, 1
      %s528 = scalar_select %p527, %s29, 1
      %s529 = smul.addr %s528, 8
      %s530 = scalar_lea.vmem %s0, %s529
      %p531 = scmp.lt.s32.totalorder %s29, 1
      %s532 = scalar_select %p531, %s29, 1
      %s533 = smul.addr %s532, 2
      %s534 = smul.addr %s533, 8
      %s535 = scalar_lea.vmem %s1, %s534
      %p536 = scmp.lt.s32.totalorder %s29, 1
      %s537 = scalar_select %p536, %s29, 1
      %s538 = smul.addr %s537, 2
      %s539 = smul.addr %s538, 8
      %s540 = scalar_lea.vmem %s16, %s539
      %v541 = vld [vmem:[%s530] sm:$0xff]
      %v542 = vld [vmem:[%s2] sm:$0xff]
      %v543 = vld [vmem:[%s2 + $0x8] sm:$0xff]
      %v544 = vld [vmem:[%s2 + $0x10] sm:$0xff]
      %v545 = vld [vmem:[%s2 + $0x18] sm:$0xff]
      %v546 = vld [vmem:[%s2 + $0x20] sm:$0xff]
      %v547 = vld [vmem:[%s2 + $0x28] sm:$0xff]
      %v548 = vld [vmem:[%s2 + $0x30] sm:$0xff]
      %v549 = vld [vmem:[%s2 + $0x38] sm:$0xff]
      %v550 = vld [vmem:[%s2 + $0x40] sm:$0xff]
      %v551 = vld [vmem:[%s2 + $0x48] sm:$0xff]
      %v552 = vld [vmem:[%s2 + $0x50] sm:$0xff]
      %v553 = vld [vmem:[%s2 + $0x58] sm:$0xff]
      %v554 = vld [vmem:[%s2 + $0x60] sm:$0xff]
      %v555 = vld [vmem:[%s2 + $0x68] sm:$0xff]
      %v556 = vld [vmem:[%s2 + $0x70] sm:$0xff]
      %v557 = vld [vmem:[%s2 + $0x78] sm:$0xff]
      %v558 = vld [vmem:[%s2 + $0x80] sm:$0xff]
      %v559 = vld [vmem:[%s2 + $0x88] sm:$0xff]
      %v560 = vld [vmem:[%s2 + $0x90] sm:$0xff]
      %v561 = vld [vmem:[%s2 + $0x98] sm:$0xff]
      %v562 = vld [vmem:[%s2 + $0xa0] sm:$0xff]
      %v563 = vld [vmem:[%s2 + $0xa8] sm:$0xff]
      %v564 = vld [vmem:[%s2 + $0xb0] sm:$0xff]
      %v565 = vld [vmem:[%s2 + $0xb8] sm:$0xff]
      %v566 = vld [vmem:[%s2 + $0xc0] sm:$0xff]
      %v567 = vld [vmem:[%s2 + $0xc8] sm:$0xff]
      %v568 = vld [vmem:[%s2 + $0xd0] sm:$0xff]
      %v569 = vld [vmem:[%s2 + $0xd8] sm:$0xff]
      %v570 = vld [vmem:[%s2 + $0xe0] sm:$0xff]
      %v571 = vld [vmem:[%s2 + $0xe8] sm:$0xff]
      %v572 = vld [vmem:[%s2 + $0xf0] sm:$0xff]
      %v573 = vld [vmem:[%s2 + $0xf8] sm:$0xff]
      %v574 = vld [vmem:[%s2 + $0x100] sm:$0xff]
      %v575 = vld [vmem:[%s2 + $0x108] sm:$0xff]
      %v576 = vld [vmem:[%s2 + $0x110] sm:$0xff]
      %v577 = vld [vmem:[%s2 + $0x118] sm:$0xff]
      %v578 = vld [vmem:[%s2 + $0x120] sm:$0xff]
      %v579 = vld [vmem:[%s2 + $0x128] sm:$0xff]
      %v580 = vld [vmem:[%s2 + $0x130] sm:$0xff]
      %v581 = vld [vmem:[%s2 + $0x138] sm:$0xff]
      %v582 = vld [vmem:[%s2 + $0x140] sm:$0xff]
      %v583 = vld [vmem:[%s2 + $0x148] sm:$0xff]
      %v584 = vld [vmem:[%s2 + $0x150] sm:$0xff]
      %v585 = vld [vmem:[%s2 + $0x158] sm:$0xff]
      %v586 = vld [vmem:[%s2 + $0x160] sm:$0xff]
      %v587 = vld [vmem:[%s2 + $0x168] sm:$0xff]
      %v588 = vld [vmem:[%s2 + $0x170] sm:$0xff]
      %v589 = vld [vmem:[%s2 + $0x178] sm:$0xff]
      %v590 = vld [vmem:[%s2 + $0x180] sm:$0xff]
      %v591 = vld [vmem:[%s2 + $0x188] sm:$0xff]
      %v592 = vld [vmem:[%s2 + $0x190] sm:$0xff]
      %v593 = vld [vmem:[%s2 + $0x198] sm:$0xff]
      %v594 = vld [vmem:[%s2 + $0x1a0] sm:$0xff]
      %v595 = vld [vmem:[%s2 + $0x1a8] sm:$0xff]
      %v596 = vld [vmem:[%s2 + $0x1b0] sm:$0xff]
      %v597 = vld [vmem:[%s2 + $0x1b8] sm:$0xff]
      %v598 = vld [vmem:[%s2 + $0x1c0] sm:$0xff]
      %v599 = vld [vmem:[%s2 + $0x1c8] sm:$0xff]
      %v600 = vld [vmem:[%s2 + $0x1d0] sm:$0xff]
      %v601 = vld [vmem:[%s2 + $0x1d8] sm:$0xff]
      %v602 = vld [vmem:[%s2 + $0x1e0] sm:$0xff]
      %v603 = vld [vmem:[%s2 + $0x1e8] sm:$0xff]
      %v604 = vld [vmem:[%s2 + $0x1f0] sm:$0xff]
      %v605 = vld [vmem:[%s2 + $0x1f8] sm:$0xff]
      %v606 = vld [vmem:[%s2 + $0x200] sm:$0xff]
      %v607 = vld [vmem:[%s2 + $0x208] sm:$0xff]
      %v608 = vld [vmem:[%s2 + $0x210] sm:$0xff]
      %v609 = vld [vmem:[%s2 + $0x218] sm:$0xff]
      %v610 = vld [vmem:[%s2 + $0x220] sm:$0xff]
      %v611 = vld [vmem:[%s2 + $0x228] sm:$0xff]
      %v612 = vld [vmem:[%s2 + $0x230] sm:$0xff]
      %v613 = vld [vmem:[%s2 + $0x238] sm:$0xff]
      %v614 = vld [vmem:[%s2 + $0x240] sm:$0xff]
      %v615 = vld [vmem:[%s2 + $0x248] sm:$0xff]
      %v616 = vld [vmem:[%s2 + $0x250] sm:$0xff]
      %v617 = vld [vmem:[%s2 + $0x258] sm:$0xff]
      %v618 = vld [vmem:[%s2 + $0x260] sm:$0xff]
      %v619 = vld [vmem:[%s2 + $0x268] sm:$0xff]
      %v620 = vld [vmem:[%s2 + $0x270] sm:$0xff]
      %v621 = vld [vmem:[%s2 + $0x278] sm:$0xff]
      %vm622 = vcmask 523264
      %v624 = vsel %vm622, %v541, 0
      %626 = vmatpush.msra.mxu0 0.0
      %627 = vmatpush.msra.mxu0 0.0
      %628 = vmatpush.msra.mxu0 0.0
      %629 = vmatpush.msra.mxu0 0.0
      %630 = vmatpush.msra.mxu0 0.0
      %631 = vmatpush.msra.mxu0 0.0
      %632 = vmatpush.msra.mxu0 0.0
      %633 = vmatpush.msra.mxu0 0.0
      %634 = vmatpush.msra.mxu0 %v612
      %635 = vmatpush.msra.mxu0 %v602
      %636 = vmatpush.msra.mxu0 %v592
      %637 = vmatpush.msra.mxu0 %v582
      %638 = vmatpush.msra.mxu0 %v572
      %639 = vmatpush.msra.mxu0 %v562
      %640 = vmatpush.msra.mxu0 %v552
      %641 = vmatpush.msra.mxu0 %v542
      %642 = vmatmul.f32.gmra.mxu0 %v624
      %v643 = vpop.f32.mrf.mxu0
      %v644 = vadd.f32 0.0, %v643
      %645 = vdwg.mxu0
      %646 = vmatpush.msra.mxu0 0.0
      %647 = vmatpush.msra.mxu0 0.0
      %648 = vmatpush.msra.mxu0 0.0
      %649 = vmatpush.msra.mxu0 0.0
      %650 = vmatpush.msra.mxu0 0.0
      %651 = vmatpush.msra.mxu0 0.0
      %652 = vmatpush.msra.mxu0 0.0
      %653 = vmatpush.msra.mxu0 0.0
      %654 = vmatpush.msra.mxu0 %v613
      %655 = vmatpush.msra.mxu0 %v603
      %656 = vmatpush.msra.mxu0 %v593
      %657 = vmatpush.msra.mxu0 %v583
      %658 = vmatpush.msra.mxu0 %v573
      %659 = vmatpush.msra.mxu0 %v563
      %660 = vmatpush.msra.mxu0 %v553
      %661 = vmatpush.msra.mxu0 %v543
      %662 = vmatmul.f32.gmra.mxu0 %v624
      %v663 = vpop.f32.mrf.mxu0
      %v664 = vadd.f32 0.0, %v663
      %665 = vdwg.mxu0
      %666 = vmatpush.msra.mxu0 0.0
      %667 = vmatpush.msra.mxu0 0.0
      %668 = vmatpush.msra.mxu0 0.0
      %669 = vmatpush.msra.mxu0 0.0
      %670 = vmatpush.msra.mxu0 0.0
      %671 = vmatpush.msra.mxu0 0.0
      %672 = vmatpush.msra.mxu0 0.0
      %673 = vmatpush.msra.mxu0 0.0
      %674 = vmatpush.msra.mxu0 %v614
      %675 = vmatpush.msra.mxu0 %v604
      %676 = vmatpush.msra.mxu0 %v594
      %677 = vmatpush.msra.mxu0 %v584
      %678 = vmatpush.msra.mxu0 %v574
      %679 = vmatpush.msra.mxu0 %v564
      %680 = vmatpush.msra.mxu0 %v554
      %681 = vmatpush.msra.mxu0 %v544
      %682 = vmatmul.f32.gmra.mxu0 %v624
      %v683 = vpop.f32.mrf.mxu0
      %v684 = vadd.f32 0.0, %v683
      %685 = vdwg.mxu0
      %686 = vmatpush.msra.mxu0 0.0
      %687 = vmatpush.msra.mxu0 0.0
      %688 = vmatpush.msra.mxu0 0.0
      %689 = vmatpush.msra.mxu0 0.0
      %690 = vmatpush.msra.mxu0 0.0
      %691 = vmatpush.msra.mxu0 0.0
      %692 = vmatpush.msra.mxu0 0.0
      %693 = vmatpush.msra.mxu0 0.0
      %694 = vmatpush.msra.mxu0 %v615
      %695 = vmatpush.msra.mxu0 %v605
      %696 = vmatpush.msra.mxu0 %v595
      %697 = vmatpush.msra.mxu0 %v585
      %698 = vmatpush.msra.mxu0 %v575
      %699 = vmatpush.msra.mxu0 %v565
      %700 = vmatpush.msra.mxu0 %v555
      %701 = vmatpush.msra.mxu0 %v545
      %702 = vmatmul.f32.gmra.mxu0 %v624
      %v703 = vpop.f32.mrf.mxu0
      %v704 = vadd.f32 0.0, %v703
      %705 = vdwg.mxu0
      %706 = vmatpush.msra.mxu0 0.0
      %707 = vmatpush.msra.mxu0 0.0
      %708 = vmatpush.msra.mxu0 0.0
      %709 = vmatpush.msra.mxu0 0.0
      %710 = vmatpush.msra.mxu0 0.0
      %711 = vmatpush.msra.mxu0 0.0
      %712 = vmatpush.msra.mxu0 0.0
      %713 = vmatpush.msra.mxu0 0.0
      %714 = vmatpush.msra.mxu0 %v616
      %715 = vmatpush.msra.mxu0 %v606
      %716 = vmatpush.msra.mxu0 %v596
      %717 = vmatpush.msra.mxu0 %v586
      %718 = vmatpush.msra.mxu0 %v576
      %719 = vmatpush.msra.mxu0 %v566
      %720 = vmatpush.msra.mxu0 %v556
      %721 = vmatpush.msra.mxu0 %v546
      %722 = vmatmul.f32.gmra.mxu0 %v624
      %v723 = vpop.f32.mrf.mxu0
      %v724 = vadd.f32 0.0, %v723
      %725 = vdwg.mxu0
      %726 = vmatpush.msra.mxu0 0.0
      %727 = vmatpush.msra.mxu0 0.0
      %728 = vmatpush.msra.mxu0 0.0
      %729 = vmatpush.msra.mxu0 0.0
      %730 = vmatpush.msra.mxu0 0.0
      %731 = vmatpush.msra.mxu0 0.0
      %732 = vmatpush.msra.mxu0 0.0
      %733 = vmatpush.msra.mxu0 0.0
      %734 = vmatpush.msra.mxu0 %v617
      %735 = vmatpush.msra.mxu0 %v607
      %736 = vmatpush.msra.mxu0 %v597
      %737 = vmatpush.msra.mxu0 %v587
      %738 = vmatpush.msra.mxu0 %v577
      %739 = vmatpush.msra.mxu0 %v567
      %740 = vmatpush.msra.mxu0 %v557
      %741 = vmatpush.msra.mxu0 %v547
      %742 = vmatmul.f32.gmra.mxu0 %v624
      %v743 = vpop.f32.mrf.mxu0
      %v744 = vadd.f32 0.0, %v743
      %745 = vdwg.mxu0
      %746 = vmatpush.msra.mxu0 0.0
      %747 = vmatpush.msra.mxu0 0.0
      %748 = vmatpush.msra.mxu0 0.0
      %749 = vmatpush.msra.mxu0 0.0
      %750 = vmatpush.msra.mxu0 0.0
      %751 = vmatpush.msra.mxu0 0.0
      %752 = vmatpush.msra.mxu0 0.0
      %753 = vmatpush.msra.mxu0 0.0
      %754 = vmatpush.msra.mxu0 %v618
      %755 = vmatpush.msra.mxu0 %v608
      %756 = vmatpush.msra.mxu0 %v598
      %757 = vmatpush.msra.mxu0 %v588
      %758 = vmatpush.msra.mxu0 %v578
      %759 = vmatpush.msra.mxu0 %v568
      %760 = vmatpush.msra.mxu0 %v558
      %761 = vmatpush.msra.mxu0 %v548
      %762 = vmatmul.f32.gmra.mxu0 %v624
      %v763 = vpop.f32.mrf.mxu0
      %v764 = vadd.f32 0.0, %v763
      %765 = vdwg.mxu0
      %766 = vmatpush.msra.mxu0 0.0
      %767 = vmatpush.msra.mxu0 0.0
      %768 = vmatpush.msra.mxu0 0.0
      %769 = vmatpush.msra.mxu0 0.0
      %770 = vmatpush.msra.mxu0 0.0
      %771 = vmatpush.msra.mxu0 0.0
      %772 = vmatpush.msra.mxu0 0.0
      %773 = vmatpush.msra.mxu0 0.0
      %774 = vmatpush.msra.mxu0 %v619
      %775 = vmatpush.msra.mxu0 %v609
      %776 = vmatpush.msra.mxu0 %v599
      %777 = vmatpush.msra.mxu0 %v589
      %778 = vmatpush.msra.mxu0 %v579
      %779 = vmatpush.msra.mxu0 %v569
      %780 = vmatpush.msra.mxu0 %v559
      %781 = vmatpush.msra.mxu0 %v549
      %782 = vmatmul.f32.gmra.mxu0 %v624
      %v783 = vpop.f32.mrf.mxu0
      %v784 = vadd.f32 0.0, %v783
      %785 = vdwg.mxu0
      %786 = vmatpush.msra.mxu0 0.0
      %787 = vmatpush.msra.mxu0 0.0
      %788 = vmatpush.msra.mxu0 0.0
      %789 = vmatpush.msra.mxu0 0.0
      %790 = vmatpush.msra.mxu0 0.0
      %791 = vmatpush.msra.mxu0 0.0
      %792 = vmatpush.msra.mxu0 0.0
      %793 = vmatpush.msra.mxu0 0.0
      %794 = vmatpush.msra.mxu0 %v620
      %795 = vmatpush.msra.mxu0 %v610
      %796 = vmatpush.msra.mxu0 %v600
      %797 = vmatpush.msra.mxu0 %v590
      %798 = vmatpush.msra.mxu0 %v580
      %799 = vmatpush.msra.mxu0 %v570
      %800 = vmatpush.msra.mxu0 %v560
      %801 = vmatpush.msra.mxu0 %v550
      %802 = vmatmul.f32.gmra.mxu0 %v624
      %v803 = vpop.f32.mrf.mxu0
      %v804 = vadd.f32 0.0, %v803
      %805 = vdwg.mxu0
      %806 = vmatpush.msra.mxu0 0.0
      %807 = vmatpush.msra.mxu0 0.0
      %808 = vmatpush.msra.mxu0 0.0
      %809 = vmatpush.msra.mxu0 0.0
      %810 = vmatpush.msra.mxu0 0.0
      %811 = vmatpush.msra.mxu0 0.0
      %812 = vmatpush.msra.mxu0 0.0
      %813 = vmatpush.msra.mxu0 0.0
      %814 = vmatpush.msra.mxu0 %v621
      %815 = vmatpush.msra.mxu0 %v611
      %816 = vmatpush.msra.mxu0 %v601
      %817 = vmatpush.msra.mxu0 %v591
      %818 = vmatpush.msra.mxu0 %v581
      %819 = vmatpush.msra.mxu0 %v571
      %820 = vmatpush.msra.mxu0 %v561
      %821 = vmatpush.msra.mxu0 %v551
      %822 = vmatmul.f32.gmra.mxu0 %v624
      %v823 = vpop.f32.mrf.mxu0
      %v824 = vadd.f32 0.0, %v823
      %825 = vdwg.mxu0
      %826 = vst [vmem:[#allocation2] sm:$0xff] %v644
      %827 = vst [vmem:[#allocation2 + $0x8] sm:$0xff] %v664
      %828 = vst [vmem:[#allocation2 + $0x10] sm:$0xff] %v684
      %829 = vst [vmem:[#allocation2 + $0x18] sm:$0xff] %v704
      %830 = vst [vmem:[#allocation2 + $0x20] sm:$0xff] %v724
      %831 = vst [vmem:[#allocation2 + $0x28] sm:$0xff] %v744
      %832 = vst [vmem:[#allocation2 + $0x30] sm:$0xff] %v764
      %833 = vst [vmem:[#allocation2 + $0x38] sm:$0xff] %v784
      %v834 = vld [vmem:[%s3] sm:$0xff]
      %v835 = vld [vmem:[#allocation2] sm:$0xff]
      %v836 = vld [vmem:[#allocation2 + $0x8] sm:$0xff]
      %v837 = vld [vmem:[#allocation2 + $0x10] sm:$0xff]
      %v838 = vld [vmem:[#allocation2 + $0x18] sm:$0xff]
      %v839 = vld [vmem:[#allocation2 + $0x20] sm:$0xff]
      %v840 = vld [vmem:[#allocation2 + $0x28] sm:$0xff]
      %v841 = vld [vmem:[#allocation2 + $0x30] sm:$0xff]
      %v842 = vld [vmem:[#allocation2 + $0x38] sm:$0xff]
      %v843 = vld [vmem:[%s4] sm:$0xff]
      %845 = vset.pattern.permute.xlu0 0
      %846 = vperm.xlu0 %845, %v843
      %v847 = vpop.permute.xlu0 %846
      %vm849 = vcmask 261120
      %v851 = vsel %vm849, %v834, 0
      %853 = vmatpush.msra.mxu0 0.0
      %854 = vmatpush.msra.mxu0 0.0
      %855 = vmatpush.msra.mxu0 0.0
      %856 = vmatpush.msra.mxu0 0.0
      %857 = vmatpush.msra.mxu0 0.0
      %858 = vmatpush.msra.mxu0 0.0
      %859 = vmatpush.msra.mxu0 0.0
      %860 = vmatpush.msra.mxu0 0.0
      %861 = vmatpush.msra.mxu0 0.0
      %862 = vmatpush.msra.mxu0 0.0
      %863 = vmatpush.msra.mxu0 0.0
      %864 = vmatpush.msra.mxu0 0.0
      %865 = vmatpush.msra.mxu0 %v841
      %866 = vmatpush.msra.mxu0 %v839
      %867 = vmatpush.msra.mxu0 %v837
      %868 = vmatpush.msra.mxu0 %v835
      %869 = vmatmul.f32.gmra.mxu0 %v851
      %v870 = vpop.f32.mrf.mxu0
      %v871 = vadd.f32 %v847, %v870
      %872 = vdwg.mxu0
      %873 = vmatpush.msra.mxu0 0.0
      %874 = vmatpush.msra.mxu0 0.0
      %875 = vmatpush.msra.mxu0 0.0
      %876 = vmatpush.msra.mxu0 0.0
      %877 = vmatpush.msra.mxu0 0.0
      %878 = vmatpush.msra.mxu0 0.0
      %879 = vmatpush.msra.mxu0 0.0
      %880 = vmatpush.msra.mxu0 0.0
      %881 = vmatpush.msra.mxu0 0.0
      %882 = vmatpush.msra.mxu0 0.0
      %883 = vmatpush.msra.mxu0 0.0
      %884 = vmatpush.msra.mxu0 0.0
      %885 = vmatpush.msra.mxu0 %v842
      %886 = vmatpush.msra.mxu0 %v840
      %887 = vmatpush.msra.mxu0 %v838
      %888 = vmatpush.msra.mxu0 %v836
      %889 = vmatmul.f32.gmra.mxu0 %v851
      %v890 = vpop.f32.mrf.mxu0
      %v891 = vadd.f32 %v847, %v890
      %892 = vdwg.mxu0
      %v893 = vld [vmem:[%s5] sm:$0xf]
      %v894 = vld [vmem:[%s6] sm:$0xf]
      %896 = vset.pattern.permute.xlu0 0
      %897 = vperm.xlu0 %896, %v894
      %v898 = vpop.permute.xlu0 %897
      %vm900 = vcmask 64512
      %v902 = vsel %vm900, %v893, 0
      %904 = vmatpush.msra.mxu0 0.0
      %905 = vmatpush.msra.mxu0 0.0
      %906 = vmatpush.msra.mxu0 0.0
      %907 = vmatpush.msra.mxu0 0.0
      %908 = vmatpush.msra.mxu0 0.0
      %909 = vmatpush.msra.mxu0 0.0
      %910 = vmatpush.msra.mxu0 0.0
      %911 = vmatpush.msra.mxu0 0.0
      %912 = vmatpush.msra.mxu0 0.0
      %913 = vmatpush.msra.mxu0 0.0
      %914 = vmatpush.msra.mxu0 0.0
      %915 = vmatpush.msra.mxu0 0.0
      %916 = vmatpush.msra.mxu0 0.0
      %917 = vmatpush.msra.mxu0 0.0
      %918 = vmatpush.msra.mxu0 0.0
      %919 = vmatpush.msra.mxu0 %v804
      %920 = vmatmul.f32.gmra.mxu0 %v902
      %v921 = vpop.f32.mrf.mxu0
      %v922 = vadd.f32 %v898, %v921
      %923 = vdwg.mxu0
      %924 = vmatpush.msra.mxu0 0.0
      %925 = vmatpush.msra.mxu0 0.0
      %926 = vmatpush.msra.mxu0 0.0
      %927 = vmatpush.msra.mxu0 0.0
      %928 = vmatpush.msra.mxu0 0.0
      %929 = vmatpush.msra.mxu0 0.0
      %930 = vmatpush.msra.mxu0 0.0
      %931 = vmatpush.msra.mxu0 0.0
      %932 = vmatpush.msra.mxu0 0.0
      %933 = vmatpush.msra.mxu0 0.0
      %934 = vmatpush.msra.mxu0 0.0
      %935 = vmatpush.msra.mxu0 0.0
      %936 = vmatpush.msra.mxu0 0.0
      %937 = vmatpush.msra.mxu0 0.0
      %938 = vmatpush.msra.mxu0 0.0
      %939 = vmatpush.msra.mxu0 %v824
      %940 = vmatmul.f32.gmra.mxu0 %v902
      %v941 = vpop.f32.mrf.mxu0
      %v942 = vadd.f32 %v898, %v941
      %943 = vdwg.mxu0
      %v944 = vmax.f32 %v922, 0.0
      %v945 = vmax.f32 %v942, 0.0
      %v946 = vld [vmem:[%s7] sm:$0xf]
      %v947 = vld [vmem:[%s535] sm:$0xff]
      %v948 = vld [vmem:[%s535 + $0x8] sm:$0xff]
      %v949 = vld [vmem:[%s8] sm:$0xf]
      %951 = vset.pattern.permute.xlu0 0
      %952 = vperm.xlu0 %951, %v949
      %v953 = vpop.permute.xlu0 %952
      %v956 = vsel %vm900, %v946, 0
      %958 = vmatpush.msra.mxu0 0.0
      %959 = vmatpush.msra.mxu0 0.0
      %960 = vmatpush.msra.mxu0 0.0
      %961 = vmatpush.msra.mxu0 0.0
      %962 = vmatpush.msra.mxu0 0.0
      %963 = vmatpush.msra.mxu0 0.0
      %964 = vmatpush.msra.mxu0 0.0
      %965 = vmatpush.msra.mxu0 0.0
      %966 = vmatpush.msra.mxu0 0.0
      %967 = vmatpush.msra.mxu0 0.0
      %968 = vmatpush.msra.mxu0 0.0
      %969 = vmatpush.msra.mxu0 0.0
      %970 = vmatpush.msra.mxu0 0.0
      %971 = vmatpush.msra.mxu0 0.0
      %972 = vmatpush.msra.mxu0 0.0
      %973 = vmatpush.msra.mxu0 %v947
      %974 = vmatmul.f32.gmra.mxu0 %v956
      %v975 = vpop.f32.mrf.mxu0
      %v976 = vadd.f32 %v953, %v975
      %977 = vdwg.mxu0
      %978 = vmatpush.msra.mxu0 0.0
      %979 = vmatpush.msra.mxu0 0.0
      %980 = vmatpush.msra.mxu0 0.0
      %981 = vmatpush.msra.mxu0 0.0
      %982 = vmatpush.msra.mxu0 0.0
      %983 = vmatpush.msra.mxu0 0.0
      %984 = vmatpush.msra.mxu0 0.0
      %985 = vmatpush.msra.mxu0 0.0
      %986 = vmatpush.msra.mxu0 0.0
      %987 = vmatpush.msra.mxu0 0.0
      %988 = vmatpush.msra.mxu0 0.0
      %989 = vmatpush.msra.mxu0 0.0
      %990 = vmatpush.msra.mxu0 0.0
      %991 = vmatpush.msra.mxu0 0.0
      %992 = vmatpush.msra.mxu0 0.0
      %993 = vmatpush.msra.mxu0 %v948
      %994 = vmatmul.f32.gmra.mxu0 %v956
      %v995 = vpop.f32.mrf.mxu0
      %v996 = vadd.f32 %v953, %v995
      %997 = vdwg.mxu0
      %v998 = vmax.f32 %v976, 0.0
      %v999 = vmax.f32 %v996, 0.0
      %v1000 = vadd.f32 %v944, %v998
      %v1001 = vadd.f32 %v945, %v999
      %v1002 = vld [vmem:[%s9] sm:$0xf]
      %1004 = vset.pattern.permute.xlu0 0
      %1005 = vperm.xlu0 %1004, %v1002
      %v1006 = vpop.permute.xlu0 %1005
      %v1008 = vmul.f32 %v1000, %v1006
      %v1009 = vmul.f32 %v1001, %v1006
      %vm1010 = vcmask 1043456
      %v1011 = vsel %vm1010, %v1008, 0.0
      %v1012 = vrot.slane %v1011, 4
      %v1013 = vadd.f32 %v1011, %v1012
      %v1014 = vrot.slane %v1013, 2
      %v1015 = vadd.f32 %v1013, %v1014
      %v1016 = vrot.slane %v1015, 1
      %v1017 = vadd.f32 %v1015, %v1016
      %v1018 = vsel %vm1010, %v1009, 0.0
      %v1019 = vrot.slane %v1018, 4
      %v1020 = vadd.f32 %v1018, %v1019
      %v1021 = vrot.slane %v1020, 2
      %v1022 = vadd.f32 %v1020, %v1021
      %v1023 = vrot.slane %v1022, 1
      %v1024 = vadd.f32 %v1022, %v1023
      %v1025 = vld [vmem:[#allocation7] sm:$0x1]
      %1027 = vset.pattern.permute.xlu0 0
      %1028 = vperm.xlu0 %1027, %v1025
      %v1029 = vpop.permute.xlu0 %1028
      %v1031 = vperm.slane %v1029, 0
      %v1032 = vadd.f32 %v1017, %v1031
      %v1033 = vadd.f32 %v1024, %v1031
      %v1034 = vxor.u32 %v1032, 2147483648
      %v1035 = vxor.u32 %v1033, 2147483648
      %v1036 = vmul.f32 %v1034, 1.442695
      %v1037 = vpow.pop %v1036
      %v1038 = vmul.f32 %v1035, 1.442695
      %v1039 = vpow.pop %v1038
      %v1040 = vadd.f32 %v1037, 1.0
      %v1041 = vadd.f32 %v1039, 1.0
      %v1042 = vrcp.pop %v1040
      %v1043 = vmul.f32 %v1040, %v1042
      %v1044 = vsub.f32 1.0, %v1043
      %v1045 = vmul.f32 %v1042, %v1044
      %v1046 = vadd.f32 %v1042, %v1045
      %vm1047 = vweird.f32 %v1040
      %vm1048 = vweird.f32 %v1042
      %vm1049 = vmor %vm1047, %vm1048
      %v1050 = vsel %vm1049, %v1042, %v1046
      %v1051 = vand.u32 2147483647, %v1040
      %vm1052 = vcmp.eq.f32.partialorder %v1051, 8.507059e+37
      %v1053 = vand.u32 %v1040, 2147483648
      %v1054 = vor.u32 1.1754944e-38, %v1053
      %v1055 = vsel %vm1052, %v1054, %v1050
      %v1056 = vmul.f32 1.0, %v1055
      %v1057 = vrcp.pop %v1041
      %v1058 = vmul.f32 %v1041, %v1057
      %v1059 = vsub.f32 1.0, %v1058
      %v1060 = vmul.f32 %v1057, %v1059
      %v1061 = vadd.f32 %v1057, %v1060
      %vm1062 = vweird.f32 %v1041
      %vm1063 = vweird.f32 %v1057
      %vm1064 = vmor %vm1062, %vm1063
      %v1065 = vsel %vm1064, %v1057, %v1061
      %v1066 = vand.u32 2147483647, %v1041
      %vm1067 = vcmp.eq.f32.partialorder %v1066, 8.507059e+37
      %v1068 = vand.u32 %v1041, 2147483648
      %v1069 = vor.u32 1.1754944e-38, %v1068
      %v1070 = vsel %vm1067, %v1069, %v1065
      %v1071 = vmul.f32 1.0, %v1070
      %v1072 = vmul.f32 %v947, %v1056
      %v1073 = vmul.f32 %v948, %v1071
      %v1074 = vlaneseq
      %v1075 = vand.u32 %v1074, 127
      %v1076 = vadd.s32 %v1075, 128
      %vm1077 = vcmp.lt.s32.totalorder %v1075, 0
      %v1078 = vsub.s32 0, %v1075
      %v1079 = vsel %vm1077, %v1078, %v1075
      %v1080 = vshrl.u32 %v1079, 4
      %v1081 = vand.u32 %v1079, 15
      %v1082 = vsub.s32 0, %v1081
      %v1083 = vsel %vm1077, %v1082, %v1081
      %vm1084 = vcmp.lt.s32.totalorder %v1076, 0
      %v1085 = vsub.s32 0, %v1076
      %v1086 = vsel %vm1084, %v1085, %v1076
      %v1087 = vshrl.u32 %v1086, 4
      %v1088 = vand.u32 %v1086, 15
      %v1089 = vsub.s32 0, %v1088
      %v1090 = vsel %vm1084, %v1089, %v1088
      %vm1091 = vcmp.ne.s32.totalorder %v1083, 0
      %vm1092 = vcmp.ne.s32.totalorder %v1090, 0
      %vm1093 = vcmp.lt.s32.totalorder %v1083, 0
      %vm1094 = vcmp.lt.s32.totalorder %v1090, 0
      %vm1095 = vmand %vm1093, %vm1091
      %vm1096 = vmand %vm1094, %vm1092
      %v1097 = vadd.s32 %v1083, 16
      %v1098 = vadd.s32 %v1090, 16
      %v1099 = vsel %vm1095, %v1097, %v1083
      %v1100 = vsel %vm1096, %v1098, %v1090
      %vm1101 = vcmp.gt.s32.totalorder %v1099, 0
      %vm1102 = vcmp.gt.s32.totalorder %v1100, 0
      %v1103 = vsel %vm1101, 1, 0
      %v1104 = vsel %vm1102, 1, 0
      %v1105 = vcvt.s32.f32 %v1103
      %v1106 = vcvt.s32.f32 %v1104
      %vm1107 = vcmp.lt.s32.totalorder %v1099, 15
      %vm1108 = vcmp.lt.s32.totalorder %v1100, 15
      %v1109 = vsel %vm1107, 1, 0
      %v1110 = vsel %vm1108, 1, 0
      %v1111 = vcvt.s32.f32 %v1109
      %v1112 = vcvt.s32.f32 %v1110
      %1113 = vst [vmem:[#allocation3] sm:$0xff] 0.0
      %1114 = vst [vmem:[#allocation3 + $0x20] sm:$0xff] 0.0
      %1115 = vst [vmem:[#allocation3 + $0x18] sm:$0xff] 0.0
      %1116 = vst [vmem:[#allocation3 + $0x38] sm:$0xff] 0.0
      %1117 = vst [vmem:[#allocation3 + $0x8] sm:$0xff] %v1072
      %1118 = vst [vmem:[#allocation3 + $0x10] sm:$0xff] %v1073
      %1119 = vst [vmem:[#allocation3 + $0x28] sm:$0xff] %v871
      %1120 = vst [vmem:[#allocation3 + $0x30] sm:$0xff] %v891
      %v1121 = vld [vmem:[#allocation3] sm:$0xff]
      %v1122 = vld [vmem:[#allocation3 + $0x8] sm:$0xff]
      %v1123 = vld [vmem:[#allocation3 + $0x10] sm:$0xff]
      %v1124 = vld [vmem:[#allocation3 + $0x20] sm:$0xff]
      %v1125 = vld [vmem:[#allocation3 + $0x28] sm:$0xff]
      %v1126 = vld [vmem:[#allocation3 + $0x30] sm:$0xff]
      %1129 = vrot.lane.b32.xlu0 %v1105, 111
      %v1130 = vpop.permute.xlu0 %1129
      %1131 = vrot.lane.b32.xlu0 %v1106, 111
      %v1132 = vpop.permute.xlu0 %1131
      %vm1133 = vcmask 908288
      %v1134 = vsel %vm1133, %v1130, %v1132
      %v1138 = vmul.f32 %v1121, %v1130
      %v1139 = vmul.f32 %v1122, %v1134
      %v1140 = vmul.f32 %v1123, %v1132
      %v1141 = vmul.f32 %v1124, %v1130
      %v1142 = vmul.f32 %v1125, %v1134
      %v1143 = vmul.f32 %v1126, %v1132
      %1150 = vrot.lane.b32.xlu0 %v1138, 17
      %v1151 = vpop.permute.xlu0 %1150
      %1152 = vrot.lane.b32.xlu0 %v1139, 17
      %v1153 = vpop.permute.xlu0 %1152
      %1154 = vrot.lane.b32.xlu0 %v1140, 17
      %v1155 = vpop.permute.xlu0 %1154
      %1156 = vrot.lane.b32.xlu0 %v1141, 17
      %v1157 = vpop.permute.xlu0 %1156
      %1158 = vrot.lane.b32.xlu0 %v1142, 17
      %v1159 = vpop.permute.xlu0 %1158
      %1160 = vrot.lane.b32.xlu0 %v1143, 17
      %v1161 = vpop.permute.xlu0 %1160
      %vm1162 = vcmask 138240
      %v1163 = vsel %vm1162, %v1151, %v1153
      %v1164 = vsel %vm1162, %v1153, %v1155
      %v1165 = vsel %vm1162, %v1157, %v1159
      %v1166 = vsel %vm1162, %v1159, %v1161
      %1171 = vst [vmem:[#allocation5] sm:$0xff] %v1163
      %1172 = vst [vmem:[#allocation5 + $0x8] sm:$0xff] %v1164
      %1173 = vst [vmem:[#allocation5 + $0x10] sm:$0xff] %v1165
      %1174 = vst [vmem:[#allocation5 + $0x18] sm:$0xff] %v1166
      %v1175 = vld [vmem:[#allocation3] sm:$0xff]
      %v1176 = vld [vmem:[#allocation3 + $0x8] sm:$0xff]
      %v1177 = vld [vmem:[#allocation3 + $0x10] sm:$0xff]
      %v1178 = vld [vmem:[#allocation3 + $0x20] sm:$0xff]
      %v1179 = vld [vmem:[#allocation3 + $0x28] sm:$0xff]
      %v1180 = vld [vmem:[#allocation3 + $0x30] sm:$0xff]
      %1187 = vrot.lane.b32.xlu0 %v1175, 16
      %v1188 = vpop.permute.xlu0 %1187
      %1189 = vrot.lane.b32.xlu0 %v1176, 16
      %v1190 = vpop.permute.xlu0 %1189
      %1191 = vrot.lane.b32.xlu0 %v1177, 16
      %v1192 = vpop.permute.xlu0 %1191
      %1193 = vrot.lane.b32.xlu0 %v1178, 16
      %v1194 = vpop.permute.xlu0 %1193
      %1195 = vrot.lane.b32.xlu0 %v1179, 16
      %v1196 = vpop.permute.xlu0 %1195
      %1197 = vrot.lane.b32.xlu0 %v1180, 16
      %v1198 = vpop.permute.xlu0 %1197
      %vm1199 = vcmask 130048
      %v1200 = vsel %vm1199, %v1188, %v1190
      %v1201 = vsel %vm1199, %v1190, %v1192
      %v1202 = vsel %vm1199, %v1194, %v1196
      %v1203 = vsel %vm1199, %v1196, %v1198
      %1208 = vst [vmem:[#allocation5 + $0x20] sm:$0xff] %v1200
      %1209 = vst [vmem:[#allocation5 + $0x28] sm:$0xff] %v1201
      %1210 = vst [vmem:[#allocation5 + $0x30] sm:$0xff] %v1202
      %1211 = vst [vmem:[#allocation5 + $0x38] sm:$0xff] %v1203
      %v1212 = vld [vmem:[#allocation3] sm:$0xff]
      %v1213 = vld [vmem:[#allocation3 + $0x8] sm:$0xff]
      %v1214 = vld [vmem:[#allocation3 + $0x10] sm:$0xff]
      %v1215 = vld [vmem:[#allocation3 + $0x20] sm:$0xff]
      %v1216 = vld [vmem:[#allocation3 + $0x28] sm:$0xff]
      %v1217 = vld [vmem:[#allocation3 + $0x30] sm:$0xff]
      %1220 = vrot.lane.b32.xlu0 %v1111, 113
      %v1221 = vpop.permute.xlu0 %1220
      %1222 = vrot.lane.b32.xlu0 %v1112, 113
      %v1223 = vpop.permute.xlu0 %1222
      %vm1224 = vcmask 924672
      %v1225 = vsel %vm1224, %v1221, %v1223
      %v1229 = vmul.f32 %v1212, %v1221
      %v1230 = vmul.f32 %v1213, %v1225
      %v1231 = vmul.f32 %v1214, %v1223
      %v1232 = vmul.f32 %v1215, %v1221
      %v1233 = vmul.f32 %v1216, %v1225
      %v1234 = vmul.f32 %v1217, %v1223
      %1241 = vrot.lane.b32.xlu0 %v1229, 15
      %v1242 = vpop.permute.xlu0 %1241
      %1243 = vrot.lane.b32.xlu0 %v1230, 15
      %v1244 = vpop.permute.xlu0 %1243
      %1245 = vrot.lane.b32.xlu0 %v1231, 15
      %v1246 = vpop.permute.xlu0 %1245
      %1247 = vrot.lane.b32.xlu0 %v1232, 15
      %v1248 = vpop.permute.xlu0 %1247
      %1249 = vrot.lane.b32.xlu0 %v1233, 15
      %v1250 = vpop.permute.xlu0 %1249
      %1251 = vrot.lane.b32.xlu0 %v1234, 15
      %v1252 = vpop.permute.xlu0 %1251
      %vm1253 = vcmask 121856
      %v1254 = vsel %vm1253, %v1242, %v1244
      %v1255 = vsel %vm1253, %v1244, %v1246
      %v1256 = vsel %vm1253, %v1248, %v1250
      %v1257 = vsel %vm1253, %v1250, %v1252
      %1262 = vst [vmem:[#allocation5 + $0x40] sm:$0xff] %v1254
      %1263 = vst [vmem:[#allocation5 + $0x48] sm:$0xff] %v1255
      %1264 = vst [vmem:[#allocation5 + $0x50] sm:$0xff] %v1256
      %1265 = vst [vmem:[#allocation5 + $0x58] sm:$0xff] %v1257
      %v1266 = vld [vmem:[#allocation3] sm:$0xff]
      %v1267 = vld [vmem:[#allocation3 + $0x8] sm:$0xff]
      %v1268 = vld [vmem:[#allocation3 + $0x10] sm:$0xff]
      %v1269 = vld [vmem:[#allocation3 + $0x20] sm:$0xff]
      %v1270 = vld [vmem:[#allocation3 + $0x28] sm:$0xff]
      %v1271 = vld [vmem:[#allocation3 + $0x30] sm:$0xff]
      %1272 = vrot.lane.b32.xlu0 %v1105, 127
      %v1273 = vpop.permute.xlu0 %1272
      %1274 = vrot.lane.b32.xlu0 %v1106, 127
      %v1275 = vpop.permute.xlu0 %1274
      %vm1276 = vcmask 1039360
      %v1277 = vsel %vm1276, %v1273, %v1275
      %v1281 = vmul.f32 %v1266, %v1273
      %v1282 = vmul.f32 %v1267, %v1277
      %v1283 = vmul.f32 %v1268, %v1275
      %v1284 = vmul.f32 %v1269, %v1273
      %v1285 = vmul.f32 %v1270, %v1277
      %v1286 = vmul.f32 %v1271, %v1275
      %1293 = vrot.lane.b32.xlu0 %v1281, 1
      %v1294 = vpop.permute.xlu0 %1293
      %1295 = vrot.lane.b32.xlu0 %v1282, 1
      %v1296 = vpop.permute.xlu0 %1295
      %1297 = vrot.lane.b32.xlu0 %v1283, 1
      %v1298 = vpop.permute.xlu0 %1297
      %1299 = vrot.lane.b32.xlu0 %v1284, 1
      %v1300 = vpop.permute.xlu0 %1299
      %1301 = vrot.lane.b32.xlu0 %v1285, 1
      %v1302 = vpop.permute.xlu0 %1301
      %1303 = vrot.lane.b32.xlu0 %v1286, 1
      %v1304 = vpop.permute.xlu0 %1303
      %vm1305 = vcmask 7168
      %v1306 = vsel %vm1305, %v1294, %v1296
      %v1307 = vsel %vm1305, %v1296, %v1298
      %v1308 = vsel %vm1305, %v1300, %v1302
      %v1309 = vsel %vm1305, %v1302, %v1304
      %1314 = vst [vmem:[#allocation5 + $0x60] sm:$0xff] %v1306
      %1315 = vst [vmem:[#allocation5 + $0x68] sm:$0xff] %v1307
      %1316 = vst [vmem:[#allocation5 + $0x70] sm:$0xff] %v1308
      %1317 = vst [vmem:[#allocation5 + $0x78] sm:$0xff] %v1309
      %v1318 = vld [vmem:[#allocation3 + $0x8] sm:$0xff]
      %v1319 = vld [vmem:[#allocation3 + $0x10] sm:$0xff]
      %v1320 = vld [vmem:[#allocation3 + $0x28] sm:$0xff]
      %v1321 = vld [vmem:[#allocation3 + $0x30] sm:$0xff]
      %1322 = vst [vmem:[#allocation5 + $0x80] sm:$0xff] %v1318
      %1323 = vst [vmem:[#allocation5 + $0x88] sm:$0xff] %v1319
      %1324 = vst [vmem:[#allocation5 + $0x90] sm:$0xff] %v1320
      %1325 = vst [vmem:[#allocation5 + $0x98] sm:$0xff] %v1321
      %v1326 = vld [vmem:[#allocation3 + $0x8] sm:$0xff]
      %v1327 = vld [vmem:[#allocation3 + $0x10] sm:$0xff]
      %v1328 = vld [vmem:[#allocation3 + $0x18] sm:$0xff]
      %v1329 = vld [vmem:[#allocation3 + $0x28] sm:$0xff]
      %v1330 = vld [vmem:[#allocation3 + $0x30] sm:$0xff]
      %v1331 = vld [vmem:[#allocation3 + $0x38] sm:$0xff]
      %1332 = vrot.lane.b32.xlu0 %v1111, 1
      %v1333 = vpop.permute.xlu0 %1332
      %1334 = vrot.lane.b32.xlu0 %v1112, 1
      %v1335 = vpop.permute.xlu0 %1334
      %v1336 = vsel %vm1305, %v1333, %v1335
      %v1340 = vmul.f32 %v1326, %v1333
      %v1341 = vmul.f32 %v1327, %v1336
      %v1342 = vmul.f32 %v1328, %v1335
      %v1343 = vmul.f32 %v1329, %v1333
      %v1344 = vmul.f32 %v1330, %v1336
      %v1345 = vmul.f32 %v1331, %v1335
      %1352 = vrot.lane.b32.xlu0 %v1340, 127
      %v1353 = vpop.permute.xlu0 %1352
      %1354 = vrot.lane.b32.xlu0 %v1341, 127
      %v1355 = vpop.permute.xlu0 %1354
      %1356 = vrot.lane.b32.xlu0 %v1342, 127
      %v1357 = vpop.permute.xlu0 %1356
      %1358 = vrot.lane.b32.xlu0 %v1343, 127
      %v1359 = vpop.permute.xlu0 %1358
      %1360 = vrot.lane.b32.xlu0 %v1344, 127
      %v1361 = vpop.permute.xlu0 %1360
      %1362 = vrot.lane.b32.xlu0 %v1345, 127
      %v1363 = vpop.permute.xlu0 %1362
      %v1364 = vsel %vm1276, %v1353, %v1355
      %v1365 = vsel %vm1276, %v1355, %v1357
      %v1366 = vsel %vm1276, %v1359, %v1361
      %v1367 = vsel %vm1276, %v1361, %v1363
      %1372 = vst [vmem:[#allocation5 + $0xa0] sm:$0xff] %v1364
      %1373 = vst [vmem:[#allocation5 + $0xa8] sm:$0xff] %v1365
      %1374 = vst [vmem:[#allocation5 + $0xb0] sm:$0xff] %v1366
      %1375 = vst [vmem:[#allocation5 + $0xb8] sm:$0xff] %v1367
      %v1376 = vld [vmem:[#allocation3 + $0x8] sm:$0xff]
      %v1377 = vld [vmem:[#allocation3 + $0x10] sm:$0xff]
      %v1378 = vld [vmem:[#allocation3 + $0x18] sm:$0xff]
      %v1379 = vld [vmem:[#allocation3 + $0x28] sm:$0xff]
      %v1380 = vld [vmem:[#allocation3 + $0x30] sm:$0xff]
      %v1381 = vld [vmem:[#allocation3 + $0x38] sm:$0xff]
      %1382 = vrot.lane.b32.xlu0 %v1105, 15
      %v1383 = vpop.permute.xlu0 %1382
      %1384 = vrot.lane.b32.xlu0 %v1106, 15
      %v1385 = vpop.permute.xlu0 %1384
      %v1386 = vsel %vm1253, %v1383, %v1385
      %v1390 = vmul.f32 %v1376, %v1383
      %v1391 = vmul.f32 %v1377, %v1386
      %v1392 = vmul.f32 %v1378, %v1385
      %v1393 = vmul.f32 %v1379, %v1383
      %v1394 = vmul.f32 %v1380, %v1386
      %v1395 = vmul.f32 %v1381, %v1385
      %1402 = vrot.lane.b32.xlu0 %v1390, 113
      %v1403 = vpop.permute.xlu0 %1402
      %1404 = vrot.lane.b32.xlu0 %v1391, 113
      %v1405 = vpop.permute.xlu0 %1404
      %1406 = vrot.lane.b32.xlu0 %v1392, 113
      %v1407 = vpop.permute.xlu0 %1406
      %1408 = vrot.lane.b32.xlu0 %v1393, 113
      %v1409 = vpop.permute.xlu0 %1408
      %1410 = vrot.lane.b32.xlu0 %v1394, 113
      %v1411 = vpop.permute.xlu0 %1410
      %1412 = vrot.lane.b32.xlu0 %v1395, 113
      %v1413 = vpop.permute.xlu0 %1412
      %v1414 = vsel %vm1224, %v1403, %v1405
      %v1415 = vsel %vm1224, %v1405, %v1407
      %v1416 = vsel %vm1224, %v1409, %v1411
      %v1417 = vsel %vm1224, %v1411, %v1413
      %1422 = vst [vmem:[#allocation5 + $0xc0] sm:$0xff] %v1414
      %1423 = vst [vmem:[#allocation5 + $0xc8] sm:$0xff] %v1415
      %1424 = vst [vmem:[#allocation5 + $0xd0] sm:$0xff] %v1416
      %1425 = vst [vmem:[#allocation5 + $0xd8] sm:$0xff] %v1417
      %v1426 = vld [vmem:[#allocation3 + $0x8] sm:$0xff]
      %v1427 = vld [vmem:[#allocation3 + $0x10] sm:$0xff]
      %v1428 = vld [vmem:[#allocation3 + $0x18] sm:$0xff]
      %v1429 = vld [vmem:[#allocation3 + $0x28] sm:$0xff]
      %v1430 = vld [vmem:[#allocation3 + $0x30] sm:$0xff]
      %v1431 = vld [vmem:[#allocation3 + $0x38] sm:$0xff]
      %1438 = vrot.lane.b32.xlu0 %v1426, 112
      %v1439 = vpop.permute.xlu0 %1438
      %1440 = vrot.lane.b32.xlu0 %v1427, 112
      %v1441 = vpop.permute.xlu0 %1440
      %1442 = vrot.lane.b32.xlu0 %v1428, 112
      %v1443 = vpop.permute.xlu0 %1442
      %1444 = vrot.lane.b32.xlu0 %v1429, 112
      %v1445 = vpop.permute.xlu0 %1444
      %1446 = vrot.lane.b32.xlu0 %v1430, 112
      %v1447 = vpop.permute.xlu0 %1446
      %1448 = vrot.lane.b32.xlu0 %v1431, 112
      %v1449 = vpop.permute.xlu0 %1448
      %vm1450 = vcmask 916480
      %v1451 = vsel %vm1450, %v1439, %v1441
      %v1452 = vsel %vm1450, %v1441, %v1443
      %v1453 = vsel %vm1450, %v1445, %v1447
      %v1454 = vsel %vm1450, %v1447, %v1449
      %1459 = vst [vmem:[#allocation5 + $0xe0] sm:$0xff] %v1451
      %1460 = vst [vmem:[#allocation5 + $0xe8] sm:$0xff] %v1452
      %1461 = vst [vmem:[#allocation5 + $0xf0] sm:$0xff] %v1453
      %1462 = vst [vmem:[#allocation5 + $0xf8] sm:$0xff] %v1454
      %v1463 = vld [vmem:[#allocation3 + $0x8] sm:$0xff]
      %v1464 = vld [vmem:[#allocation3 + $0x10] sm:$0xff]
      %v1465 = vld [vmem:[#allocation3 + $0x18] sm:$0xff]
      %v1466 = vld [vmem:[#allocation3 + $0x28] sm:$0xff]
      %v1467 = vld [vmem:[#allocation3 + $0x30] sm:$0xff]
      %v1468 = vld [vmem:[#allocation3 + $0x38] sm:$0xff]
      %1469 = vrot.lane.b32.xlu0 %v1111, 17
      %v1470 = vpop.permute.xlu0 %1469
      %1471 = vrot.lane.b32.xlu0 %v1112, 17
      %v1472 = vpop.permute.xlu0 %1471
      %v1473 = vsel %vm1162, %v1470, %v1472
      %v1477 = vmul.f32 %v1463, %v1470
      %v1478 = vmul.f32 %v1464, %v1473
      %v1479 = vmul.f32 %v1465, %v1472
      %v1480 = vmul.f32 %v1466, %v1470
      %v1481 = vmul.f32 %v1467, %v1473
      %v1482 = vmul.f32 %v1468, %v1472
      %1489 = vrot.lane.b32.xlu0 %v1477, 111
      %v1490 = vpop.permute.xlu0 %1489
      %1491 = vrot.lane.b32.xlu0 %v1478, 111
      %v1492 = vpop.permute.xlu0 %1491
      %1493 = vrot.lane.b32.xlu0 %v1479, 111
      %v1494 = vpop.permute.xlu0 %1493
      %1495 = vrot.lane.b32.xlu0 %v1480, 111
      %v1496 = vpop.permute.xlu0 %1495
      %1497 = vrot.lane.b32.xlu0 %v1481, 111
      %v1498 = vpop.permute.xlu0 %1497
      %1499 = vrot.lane.b32.xlu0 %v1482, 111
      %v1500 = vpop.permute.xlu0 %1499
      %v1501 = vsel %vm1133, %v1490, %v1492
      %v1502 = vsel %vm1133, %v1492, %v1494
      %v1503 = vsel %vm1133, %v1496, %v1498
      %v1504 = vsel %vm1133, %v1498, %v1500
      %1509 = vst [vmem:[#allocation5 + $0x100] sm:$0xff] %v1501
      %1510 = vst [vmem:[#allocation5 + $0x108] sm:$0xff] %v1502
      %1511 = vst [vmem:[#allocation5 + $0x110] sm:$0xff] %v1503
      %1512 = vst [vmem:[#allocation5 + $0x118] sm:$0xff] %v1504
      %v1513 = vld [vmem:[%s11] sm:$0xff]
      %v1514 = vld [vmem:[%s11 + $0x8] sm:$0xff]
      %v1515 = vld [vmem:[%s11 + $0x10] sm:$0xff]
      %v1516 = vld [vmem:[%s11 + $0x18] sm:$0xff]
      %v1517 = vld [vmem:[#allocation5] sm:$0xff]
      %v1518 = vld [vmem:[#allocation5 + $0x8] sm:$0xff]
      %v1519 = vld [vmem:[#allocation5 + $0x10] sm:$0xff]
      %v1520 = vld [vmem:[#allocation5 + $0x18] sm:$0xff]
      %v1521 = vld [vmem:[#allocation5 + $0x20] sm:$0xff]
      %v1522 = vld [vmem:[#allocation5 + $0x28] sm:$0xff]
      %v1523 = vld [vmem:[#allocation5 + $0x30] sm:$0xff]
      %v1524 = vld [vmem:[#allocation5 + $0x38] sm:$0xff]
      %v1525 = vld [vmem:[#allocation5 + $0x40] sm:$0xff]
      %v1526 = vld [vmem:[#allocation5 + $0x48] sm:$0xff]
      %v1527 = vld [vmem:[#allocation5 + $0x50] sm:$0xff]
      %v1528 = vld [vmem:[#allocation5 + $0x58] sm:$0xff]
      %v1529 = vld [vmem:[#allocation5 + $0x60] sm:$0xff]
      %v1530 = vld [vmem:[#allocation5 + $0x68] sm:$0xff]
      %v1531 = vld [vmem:[#allocation5 + $0x70] sm:$0xff]
      %v1532 = vld [vmem:[#allocation5 + $0x78] sm:$0xff]
      %v1533 = vld [vmem:[#allocation5 + $0x80] sm:$0xff]
      %v1534 = vld [vmem:[#allocation5 + $0x88] sm:$0xff]
      %v1535 = vld [vmem:[#allocation5 + $0x90] sm:$0xff]
      %v1536 = vld [vmem:[#allocation5 + $0x98] sm:$0xff]
      %v1537 = vld [vmem:[#allocation5 + $0xa0] sm:$0xff]
      %v1538 = vld [vmem:[#allocation5 + $0xa8] sm:$0xff]
      %v1539 = vld [vmem:[#allocation5 + $0xb0] sm:$0xff]
      %v1540 = vld [vmem:[#allocation5 + $0xb8] sm:$0xff]
      %v1541 = vld [vmem:[#allocation5 + $0xc0] sm:$0xff]
      %v1542 = vld [vmem:[#allocation5 + $0xc8] sm:$0xff]
      %v1543 = vld [vmem:[#allocation5 + $0xd0] sm:$0xff]
      %v1544 = vld [vmem:[#allocation5 + $0xd8] sm:$0xff]
      %v1545 = vld [vmem:[#allocation5 + $0xe0] sm:$0xff]
      %v1546 = vld [vmem:[#allocation5 + $0xe8] sm:$0xff]
      %v1547 = vld [vmem:[#allocation5 + $0xf0] sm:$0xff]
      %v1548 = vld [vmem:[#allocation5 + $0xf8] sm:$0xff]
      %v1549 = vld [vmem:[#allocation5 + $0x100] sm:$0xff]
      %v1550 = vld [vmem:[#allocation5 + $0x108] sm:$0xff]
      %v1551 = vld [vmem:[#allocation5 + $0x110] sm:$0xff]
      %v1552 = vld [vmem:[#allocation5 + $0x118] sm:$0xff]
      %v1554 = vsel %vm1199, %v1514, 0
      %v1557 = vsel %vm1199, %v1516, 0
      %1559 = vmatpush.msra.mxu0 %v1547
      %1560 = vmatpush.msra.mxu0 %v1545
      %1561 = vmatpush.msra.mxu0 %v1543
      %1562 = vmatpush.msra.mxu0 %v1541
      %1563 = vmatpush.msra.mxu0 %v1539
      %1564 = vmatpush.msra.mxu0 %v1537
      %1565 = vmatpush.msra.mxu0 %v1535
      %1566 = vmatpush.msra.mxu0 %v1533
      %1567 = vmatpush.msra.mxu0 %v1531
      %1568 = vmatpush.msra.mxu0 %v1529
      %1569 = vmatpush.msra.mxu0 %v1527
      %1570 = vmatpush.msra.mxu0 %v1525
      %1571 = vmatpush.msra.mxu0 %v1523
      %1572 = vmatpush.msra.mxu0 %v1521
      %1573 = vmatpush.msra.mxu0 %v1519
      %1574 = vmatpush.msra.mxu0 %v1517
      %1575 = vmatmul.f32.gmra.mxu0 %v1513
      %v1576 = vpop.f32.mrf.mxu0
      %v1577 = vadd.f32 0.0, %v1576
      %1578 = vmatmul.f32.gmra.mxu0 %v1515
      %v1579 = vpop.f32.mrf.mxu0
      %v1580 = vadd.f32 0.0, %v1579
      %1581 = vdwg.mxu0
      %1582 = vmatpush.msra.mxu0 0.0
      %1583 = vmatpush.msra.mxu0 0.0
      %1584 = vmatpush.msra.mxu0 0.0
      %1585 = vmatpush.msra.mxu0 0.0
      %1586 = vmatpush.msra.mxu0 0.0
      %1587 = vmatpush.msra.mxu0 0.0
      %1588 = vmatpush.msra.mxu0 0.0
      %1589 = vmatpush.msra.mxu0 0.0
      %1590 = vmatpush.msra.mxu0 0.0
      %1591 = vmatpush.msra.mxu0 0.0
      %1592 = vmatpush.msra.mxu0 0.0
      %1593 = vmatpush.msra.mxu0 0.0
      %1594 = vmatpush.msra.mxu0 0.0
      %1595 = vmatpush.msra.mxu0 0.0
      %1596 = vmatpush.msra.mxu0 %v1551
      %1597 = vmatpush.msra.mxu0 %v1549
      %1598 = vmatmul.f32.gmra.mxu0 %v1554
      %v1599 = vpop.f32.mrf.mxu0
      %v1600 = vadd.f32 %v1577, %v1599
      %1601 = vmatmul.f32.gmra.mxu0 %v1557
      %v1602 = vpop.f32.mrf.mxu0
      %v1603 = vadd.f32 %v1580, %v1602
      %1604 = vdwg.mxu0
      %1605 = vmatpush.msra.mxu0 %v1548
      %1606 = vmatpush.msra.mxu0 %v1546
      %1607 = vmatpush.msra.mxu0 %v1544
      %1608 = vmatpush.msra.mxu0 %v1542
      %1609 = vmatpush.msra.mxu0 %v1540
      %1610 = vmatpush.msra.mxu0 %v1538
      %1611 = vmatpush.msra.mxu0 %v1536
      %1612 = vmatpush.msra.mxu0 %v1534
      %1613 = vmatpush.msra.mxu0 %v1532
      %1614 = vmatpush.msra.mxu0 %v1530
      %1615 = vmatpush.msra.mxu0 %v1528
      %1616 = vmatpush.msra.mxu0 %v1526
      %1617 = vmatpush.msra.mxu0 %v1524
      %1618 = vmatpush.msra.mxu0 %v1522
      %1619 = vmatpush.msra.mxu0 %v1520
      %1620 = vmatpush.msra.mxu0 %v1518
      %1621 = vmatmul.f32.gmra.mxu0 %v1513
      %v1622 = vpop.f32.mrf.mxu0
      %v1623 = vadd.f32 0.0, %v1622
      %1624 = vmatmul.f32.gmra.mxu0 %v1515
      %v1625 = vpop.f32.mrf.mxu0
      %v1626 = vadd.f32 0.0, %v1625
      %1627 = vdwg.mxu0
      %1628 = vmatpush.msra.mxu0 0.0
      %1629 = vmatpush.msra.mxu0 0.0
      %1630 = vmatpush.msra.mxu0 0.0
      %1631 = vmatpush.msra.mxu0 0.0
      %1632 = vmatpush.msra.mxu0 0.0
      %1633 = vmatpush.msra.mxu0 0.0
      %1634 = vmatpush.msra.mxu0 0.0
      %1635 = vmatpush.msra.mxu0 0.0
      %1636 = vmatpush.msra.mxu0 0.0
      %1637 = vmatpush.msra.mxu0 0.0
      %1638 = vmatpush.msra.mxu0 0.0
      %1639 = vmatpush.msra.mxu0 0.0
      %1640 = vmatpush.msra.mxu0 0.0
      %1641 = vmatpush.msra.mxu0 0.0
      %1642 = vmatpush.msra.mxu0 %v1552
      %1643 = vmatpush.msra.mxu0 %v1550
      %1644 = vmatmul.f32.gmra.mxu0 %v1554
      %v1645 = vpop.f32.mrf.mxu0
      %v1646 = vadd.f32 %v1623, %v1645
      %1647 = vmatmul.f32.gmra.mxu0 %v1557
      %v1648 = vpop.f32.mrf.mxu0
      %v1649 = vadd.f32 %v1626, %v1648
      %1650 = vdwg.mxu0
      %v1651 = vld [vmem:[%s13] sm:$0xff]
      %1653 = vset.pattern.permute.xlu0 0
      %1654 = vperm.xlu0 %1653, %v1651
      %v1655 = vpop.permute.xlu0 %1654
      %v1657 = vadd.f32 %v1603, %v1655
      %v1658 = vadd.f32 %v1649, %v1655
      %v1659 = vld [vmem:[%s12] sm:$0xff]
      %1661 = vset.pattern.permute.xlu0 0
      %1662 = vperm.xlu0 %1661, %v1659
      %v1663 = vpop.permute.xlu0 %1662
      %v1665 = vadd.f32 %v1600, %v1663
      %v1666 = vadd.f32 %v1646, %v1663
      %v1667 = vmax.f32 %v1665, 0.0
      %v1668 = vmax.f32 %v1666, 0.0
      %v1669 = vadd.f32 %v1667, %v1657
      %v1670 = vadd.f32 %v1668, %v1658
      %1671 = vst [vmem:[#allocation4] sm:$0xff] 0.0
      %1672 = vst [vmem:[#allocation4 + $0x18] sm:$0xff] 0.0
      %1673 = vst [vmem:[#allocation4 + $0x8] sm:$0xff] %v1669
      %1674 = vst [vmem:[#allocation4 + $0x10] sm:$0xff] %v1670
      %v1675 = vld [vmem:[#allocation4] sm:$0xff]
      %v1676 = vld [vmem:[#allocation4 + $0x8] sm:$0xff]
      %v1677 = vld [vmem:[#allocation4 + $0x10] sm:$0xff]
      %v1678 = vmul.f32 %v1675, %v1130
      %v1679 = vmul.f32 %v1676, %v1134
      %v1680 = vmul.f32 %v1677, %v1132
      %1684 = vrot.lane.b32.xlu0 %v1678, 17
      %v1685 = vpop.permute.xlu0 %1684
      %1686 = vrot.lane.b32.xlu0 %v1679, 17
      %v1687 = vpop.permute.xlu0 %1686
      %1688 = vrot.lane.b32.xlu0 %v1680, 17
      %v1689 = vpop.permute.xlu0 %1688
      %v1690 = vsel %vm1162, %v1685, %v1687
      %v1691 = vsel %vm1162, %v1687, %v1689
      %1694 = vst [vmem:[#allocation6] sm:$0xff] %v1690
      %1695 = vst [vmem:[#allocation6 + $0x8] sm:$0xff] %v1691
      %v1696 = vld [vmem:[#allocation4] sm:$0xff]
      %v1697 = vld [vmem:[#allocation4 + $0x8] sm:$0xff]
      %v1698 = vld [vmem:[#allocation4 + $0x10] sm:$0xff]
      %1702 = vrot.lane.b32.xlu0 %v1696, 16
      %v1703 = vpop.permute.xlu0 %1702
      %1704 = vrot.lane.b32.xlu0 %v1697, 16
      %v1705 = vpop.permute.xlu0 %1704
      %1706 = vrot.lane.b32.xlu0 %v1698, 16
      %v1707 = vpop.permute.xlu0 %1706
      %v1708 = vsel %vm1199, %v1703, %v1705
      %v1709 = vsel %vm1199, %v1705, %v1707
      %1712 = vst [vmem:[#allocation6 + $0x10] sm:$0xff] %v1708
      %1713 = vst [vmem:[#allocation6 + $0x18] sm:$0xff] %v1709
      %v1714 = vld [vmem:[#allocation4] sm:$0xff]
      %v1715 = vld [vmem:[#allocation4 + $0x8] sm:$0xff]
      %v1716 = vld [vmem:[#allocation4 + $0x10] sm:$0xff]
      %v1717 = vmul.f32 %v1714, %v1221
      %v1718 = vmul.f32 %v1715, %v1225
      %v1719 = vmul.f32 %v1716, %v1223
      %1723 = vrot.lane.b32.xlu0 %v1717, 15
      %v1724 = vpop.permute.xlu0 %1723
      %1725 = vrot.lane.b32.xlu0 %v1718, 15
      %v1726 = vpop.permute.xlu0 %1725
      %1727 = vrot.lane.b32.xlu0 %v1719, 15
      %v1728 = vpop.permute.xlu0 %1727
      %v1729 = vsel %vm1253, %v1724, %v1726
      %v1730 = vsel %vm1253, %v1726, %v1728
      %1733 = vst [vmem:[#allocation6 + $0x20] sm:$0xff] %v1729
      %1734 = vst [vmem:[#allocation6 + $0x28] sm:$0xff] %v1730
      %v1735 = vld [vmem:[#allocation4] sm:$0xff]
      %v1736 = vld [vmem:[#allocation4 + $0x8] sm:$0xff]
      %v1737 = vld [vmem:[#allocation4 + $0x10] sm:$0xff]
      %v1738 = vmul.f32 %v1735, %v1273
      %v1739 = vmul.f32 %v1736, %v1277
      %v1740 = vmul.f32 %v1737, %v1275
      %1744 = vrot.lane.b32.xlu0 %v1738, 1
      %v1745 = vpop.permute.xlu0 %1744
      %1746 = vrot.lane.b32.xlu0 %v1739, 1
      %v1747 = vpop.permute.xlu0 %1746
      %1748 = vrot.lane.b32.xlu0 %v1740, 1
      %v1749 = vpop.permute.xlu0 %1748
      %v1750 = vsel %vm1305, %v1745, %v1747
      %v1751 = vsel %vm1305, %v1747, %v1749
      %1754 = vst [vmem:[#allocation6 + $0x30] sm:$0xff] %v1750
      %1755 = vst [vmem:[#allocation6 + $0x38] sm:$0xff] %v1751
      %v1756 = vld [vmem:[#allocation4 + $0x8] sm:$0xff]
      %v1757 = vld [vmem:[#allocation4 + $0x10] sm:$0xff]
      %1758 = vst [vmem:[#allocation6 + $0x40] sm:$0xff] %v1756
      %1759 = vst [vmem:[#allocation6 + $0x48] sm:$0xff] %v1757
      %v1760 = vld [vmem:[#allocation4 + $0x8] sm:$0xff]
      %v1761 = vld [vmem:[#allocation4 + $0x10] sm:$0xff]
      %v1762 = vld [vmem:[#allocation4 + $0x18] sm:$0xff]
      %v1763 = vmul.f32 %v1760, %v1333
      %v1764 = vmul.f32 %v1761, %v1336
      %v1765 = vmul.f32 %v1762, %v1335
      %1769 = vrot.lane.b32.xlu0 %v1763, 127
      %v1770 = vpop.permute.xlu0 %1769
      %1771 = vrot.lane.b32.xlu0 %v1764, 127
      %v1772 = vpop.permute.xlu0 %1771
      %1773 = vrot.lane.b32.xlu0 %v1765, 127
      %v1774 = vpop.permute.xlu0 %1773
      %v1775 = vsel %vm1276, %v1770, %v1772
      %v1776 = vsel %vm1276, %v1772, %v1774
      %1779 = vst [vmem:[#allocation6 + $0x50] sm:$0xff] %v1775
      %1780 = vst [vmem:[#allocation6 + $0x58] sm:$0xff] %v1776
      %v1781 = vld [vmem:[#allocation4 + $0x8] sm:$0xff]
      %v1782 = vld [vmem:[#allocation4 + $0x10] sm:$0xff]
      %v1783 = vld [vmem:[#allocation4 + $0x18] sm:$0xff]
      %v1784 = vmul.f32 %v1781, %v1383
      %v1785 = vmul.f32 %v1782, %v1386
      %v1786 = vmul.f32 %v1783, %v1385
      %1790 = vrot.lane.b32.xlu0 %v1784, 113
      %v1791 = vpop.permute.xlu0 %1790
      %1792 = vrot.lane.b32.xlu0 %v1785, 113
      %v1793 = vpop.permute.xlu0 %1792
      %1794 = vrot.lane.b32.xlu0 %v1786, 113
      %v1795 = vpop.permute.xlu0 %1794
      %v1796 = vsel %vm1224, %v1791, %v1793
      %v1797 = vsel %vm1224, %v1793, %v1795
      %1800 = vst [vmem:[#allocation6 + $0x60] sm:$0xff] %v1796
      %1801 = vst [vmem:[#allocation6 + $0x68] sm:$0xff] %v1797
      %v1802 = vld [vmem:[#allocation4 + $0x8] sm:$0xff]
      %v1803 = vld [vmem:[#allocation4 + $0x10] sm:$0xff]
      %v1804 = vld [vmem:[#allocation4 + $0x18] sm:$0xff]
      %1808 = vrot.lane.b32.xlu0 %v1802, 112
      %v1809 = vpop.permute.xlu0 %1808
      %1810 = vrot.lane.b32.xlu0 %v1803, 112
      %v1811 = vpop.permute.xlu0 %1810
      %1812 = vrot.lane.b32.xlu0 %v1804, 112
      %v1813 = vpop.permute.xlu0 %1812
      %v1814 = vsel %vm1450, %v1809, %v1811
      %v1815 = vsel %vm1450, %v1811, %v1813
      %1818 = vst [vmem:[#allocation6 + $0x70] sm:$0xff] %v1814
      %1819 = vst [vmem:[#allocation6 + $0x78] sm:$0xff] %v1815
      %v1820 = vld [vmem:[#allocation4 + $0x8] sm:$0xff]
      %v1821 = vld [vmem:[#allocation4 + $0x10] sm:$0xff]
      %v1822 = vld [vmem:[#allocation4 + $0x18] sm:$0xff]
      %v1823 = vmul.f32 %v1820, %v1470
      %v1824 = vmul.f32 %v1821, %v1473
      %v1825 = vmul.f32 %v1822, %v1472
      %1829 = vrot.lane.b32.xlu0 %v1823, 111
      %v1830 = vpop.permute.xlu0 %1829
      %1831 = vrot.lane.b32.xlu0 %v1824, 111
      %v1832 = vpop.permute.xlu0 %1831
      %1833 = vrot.lane.b32.xlu0 %v1825, 111
      %v1834 = vpop.permute.xlu0 %1833
      %v1835 = vsel %vm1133, %v1830, %v1832
      %v1836 = vsel %vm1133, %v1832, %v1834
      %1839 = vst [vmem:[#allocation6 + $0x80] sm:$0xff] %v1835
      %1840 = vst [vmem:[#allocation6 + $0x88] sm:$0xff] %v1836
      %v1841 = vld [vmem:[%s14] sm:$0xff]
      %v1842 = vld [vmem:[#allocation6] sm:$0xff]
      %v1843 = vld [vmem:[#allocation6 + $0x8] sm:$0xff]
      %v1844 = vld [vmem:[#allocation6 + $0x10] sm:$0xff]
      %v1845 = vld [vmem:[#allocation6 + $0x18] sm:$0xff]
      %v1846 = vld [vmem:[#allocation6 + $0x20] sm:$0xff]
      %v1847 = vld [vmem:[#allocation6 + $0x28] sm:$0xff]
      %v1848 = vld [vmem:[#allocation6 + $0x30] sm:$0xff]
      %v1849 = vld [vmem:[#allocation6 + $0x38] sm:$0xff]
      %v1850 = vld [vmem:[#allocation6 + $0x40] sm:$0xff]
      %v1851 = vld [vmem:[#allocation6 + $0x48] sm:$0xff]
      %v1852 = vld [vmem:[#allocation6 + $0x50] sm:$0xff]
      %v1853 = vld [vmem:[#allocation6 + $0x58] sm:$0xff]
      %v1854 = vld [vmem:[#allocation6 + $0x60] sm:$0xff]
      %v1855 = vld [vmem:[#allocation6 + $0x68] sm:$0xff]
      %v1856 = vld [vmem:[#allocation6 + $0x70] sm:$0xff]
      %v1857 = vld [vmem:[#allocation6 + $0x78] sm:$0xff]
      %v1858 = vld [vmem:[#allocation6 + $0x80] sm:$0xff]
      %v1859 = vld [vmem:[#allocation6 + $0x88] sm:$0xff]
      %v1860 = vld [vmem:[%s15] sm:$0xff]
      %1862 = vset.pattern.permute.xlu0 0
      %1863 = vperm.xlu0 %1862, %v1860
      %v1864 = vpop.permute.xlu0 %1863
      %vm1866 = vcmask 588800
      %v1868 = vsel %vm1866, %v1841, 0
      %1870 = vmatpush.msra.mxu0 0.0
      %1871 = vmatpush.msra.mxu0 0.0
      %1872 = vmatpush.msra.mxu0 0.0
      %1873 = vmatpush.msra.mxu0 0.0
      %1874 = vmatpush.msra.mxu0 0.0
      %1875 = vmatpush.msra.mxu0 0.0
      %1876 = vmatpush.msra.mxu0 0.0
      %1877 = vmatpush.msra.mxu0 %v1858
      %1878 = vmatpush.msra.mxu0 %v1856
      %1879 = vmatpush.msra.mxu0 %v1854
      %1880 = vmatpush.msra.mxu0 %v1852
      %1881 = vmatpush.msra.mxu0 %v1850
      %1882 = vmatpush.msra.mxu0 %v1848
      %1883 = vmatpush.msra.mxu0 %v1846
      %1884 = vmatpush.msra.mxu0 %v1844
      %1885 = vmatpush.msra.mxu0 %v1842
      %1886 = vmatmul.f32.gmra.mxu0 %v1868
      %v1887 = vpop.f32.mrf.mxu0
      %v1888 = vadd.f32 %v1864, %v1887
      %1889 = vdwg.mxu0
      %1890 = vmatpush.msra.mxu0 0.0
      %1891 = vmatpush.msra.mxu0 0.0
      %1892 = vmatpush.msra.mxu0 0.0
      %1893 = vmatpush.msra.mxu0 0.0
      %1894 = vmatpush.msra.mxu0 0.0
      %1895 = vmatpush.msra.mxu0 0.0
      %1896 = vmatpush.msra.mxu0 0.0
      %1897 = vmatpush.msra.mxu0 %v1859
      %1898 = vmatpush.msra.mxu0 %v1857
      %1899 = vmatpush.msra.mxu0 %v1855
      %1900 = vmatpush.msra.mxu0 %v1853
      %1901 = vmatpush.msra.mxu0 %v1851
      %1902 = vmatpush.msra.mxu0 %v1849
      %1903 = vmatpush.msra.mxu0 %v1847
      %1904 = vmatpush.msra.mxu0 %v1845
      %1905 = vmatpush.msra.mxu0 %v1843
      %1906 = vmatmul.f32.gmra.mxu0 %v1868
      %v1907 = vpop.f32.mrf.mxu0
      %v1908 = vadd.f32 %v1864, %v1907
      %1909 = vdwg.mxu0
      %v1910 = vmax.f32 %v1888, 0.0
      %v1911 = vmax.f32 %v1908, 0.0
      %v1912 = vadd.f32 %v1910, %v1669
      %v1913 = vadd.f32 %v1911, %v1670
      %1914 = vst [vmem:[%s540] sm:$0xff] %v1912
      %1915 = vst [vmem:[%s540 + $0x8] sm:$0xff] %v1913
      %p1916 = scmp.lt.s32.totalorder %s29, 1
      %s1917 = scalar_select %p1916, %s29, 1
      %s1918 = smul.addr %s1917, 2
      %s1919 = smul.addr %s1918, 8
      %s1920 = scalar_lea.vmem %s16, %s1919
      // Predicated region
      $region85: #{enhanced_decoder_block_pallas.1} parent=83 // pred_check
        %p1921 = pneg %p393
      $region86: #{enhanced_decoder_block_pallas.1} parent=83 // pred_check_branch
        %1923 = sbr.rel (%p1921) target = $region88
      $region87: #{enhanced_decoder_block_pallas.1} parent=83 // pred_region
        _
      $region88: #{enhanced_decoder_block_pallas.1} parent=83 // pred_fallthru
        _
    $region84: #{enhanced_decoder_block_pallas.1} parent=5 // pred_fallthru
      _
    %p1924 = scmp.le.s32.totalorder 2, %s24
    // Predicated region
    $region89: #{enhanced_decoder_block_pallas.1} parent=5 // pred_check
      %p1925 = pneg %p1924
    $region90: #{enhanced_decoder_block_pallas.1} parent=5 // pred_check_branch
      %1927 = sbr.rel (%p1925) target = $region92
    $region91: #{enhanced_decoder_block_pallas.1} parent=5 // pred_region
      %s1928 = ssub.s32 %s24, 2
      // Predicated region
      $region93: #{enhanced_decoder_block_pallas.1} parent=91 // pred_check
        %p1929 = pneg %p399
      $region94: #{enhanced_decoder_block_pallas.1} parent=91 // pred_check_branch
        %1931 = sbr.rel (%p1929) target = $region96
      $region95: #{enhanced_decoder_block_pallas.1} parent=91 // pred_region
        %p1932 = scmp.lt.s32.totalorder %s30, 1
        %s1933 = scalar_select %p1932, %s30, 1
        %s1934 = smul.addr %s1933, 2
        %s1935 = smul.addr %s1934, 8
        %s1936 = scalar_lea.vmem %s16, %s1935
      $region96: #{enhanced_decoder_block_pallas.1} parent=91 // pred_fallthru
        _
    $region92: #{enhanced_decoder_block_pallas.1} parent=5 // pred_fallthru
      _
  $region6: #{enhanced_decoder_block_pallas.1} parent=0 // loop_footer
    %s28 = sadd.s32 1, %s24
  $region7: #{enhanced_decoder_block_pallas.1} parent=0 // loop_footer_branch
    %23 = sbr.rel target = $region3
  $region8: #{enhanced_decoder_block_pallas.1} parent=0 // loop_exit
    _

</llo_original>
